<compile_context>
chip_gen: v7x
topology: tpu7x:2x2x1
jax: 0.10.0
libtpu: 0.0.40
codegen_flags: <defaults>
</compile_context>

<pallas_src>
import functools

import jax
import jax.numpy as jnp
from jax.experimental import pallas as pl
from jax.experimental.pallas import tpu as pltpu


# ---------------------------------------------------------------------------
# Fused kernel (one batch element per grid step)
# ---------------------------------------------------------------------------
def _gcn_kernel(x_ref, wl1_ref, bl1_ref, wl2_ref, bl2_ref,
                wr1_ref, br1_ref, wr2_ref, br2_ref,
                o_ref,
                xh_ref, xw_ref, l1w_ref, r1h_ref,
                *, H, W, cin, cp, ks):
    """x_ref:(1,H,W*cin)  w*_ref:(ks*W*c, W*cp) bf16  b*_ref:(1,W*cp) f32
    o_ref:(1,H,W*cp)
    scratch: xh (H+2p, W*cin), xw (H, (W+2p)*cin),
             l1w (H, (W+2p)*cp), r1h (H+2p, W*cp)   -- all f32 VMEM."""
    p = ks // 2
    f32 = jnp.float32
    bf16 = jnp.bfloat16

    # Zero the padded scratch buffers every step (cheap, and safe if the
    # parallel batch axis is sharded across TensorCores).
    xh_ref[...] = jnp.zeros_like(xh_ref)
    xw_ref[...] = jnp.zeros_like(xw_ref)
    l1w_ref[...] = jnp.zeros_like(l1w_ref)
    r1h_ref[...] = jnp.zeros_like(r1h_ref)

    x = x_ref[0]                                    # (H, W*cin) f32
    xh_ref[p:p + H, :] = x                          # zero-pad along H (rows)
    xw_ref[:, p * cin:p * cin + W * cin] = x        # zero-pad along W (lanes)

    def conv_h(src_ref, w_ref, b_ref):
        # (ks,1) conv: taps shift rows of the H-padded buffer.
        # im2col -> one bf16 MXU matmul with K = ks * W * c, f32 accumulation.
        patches = jnp.concatenate(
            [src_ref[t:t + H, :] for t in range(ks)], axis=1)
        acc = jnp.dot(patches.astype(bf16), w_ref[...],
                      preferred_element_type=f32)
        return acc + b_ref[...]                     # (H, W*cp) f32

    def conv_w(src_ref, w_ref, b_ref, c):
        # (1,ks) conv: taps shift lanes (by multiples of c) of the W-padded
        # buffer -- no H<->W transpose needed anywhere.
        patches = jnp.concatenate(
            [src_ref[:, t * c:t * c + W * c] for t in range(ks)], axis=1)
        acc = jnp.dot(patches.astype(bf16), w_ref[...],
                      preferred_element_type=f32)
        return acc + b_ref[...]                     # (H, W*cp) f32

    # left branch: (ks,1) then (1,ks)
    l1 = conv_h(xh_ref, wl1_ref, bl1_ref)
    l1w_ref[:, p * cp:p * cp + W * cp] = l1         # intermediate in VMEM
    l2 = conv_w(l1w_ref, wl2_ref, bl2_ref, cp)

    # right branch: (1,ks) then (ks,1)
    r1 = conv_w(xw_ref, wr1_ref, br1_ref, cin)
    r1h_ref[p:p + H, :] = r1                        # intermediate in VMEM
    r2 = conv_h(r1h_ref, wr2_ref, br2_ref)

    # lane-dense store: last dim is W*cp (== 128 for the demo shapes)
    o_ref[0] = (l2 + r2).astype(o_ref.dtype)


# ---------------------------------------------------------------------------
# Wrapper: parameter expansion + pallas_call
# ---------------------------------------------------------------------------
def _expand_weight(w, W):
    """(ks, cin, cout) -> block-diagonal (ks*W*cin, W*cout) acting on the
    lane-flattened (w, c) layout: out lane (w, co) = sum_ci in lane (w, ci)."""
    ks, cin, cout = w.shape
    eye = jnp.eye(W, dtype=w.dtype)
    bd = jnp.einsum('ab,tio->taibo', eye, w)        # (ks, W, cin, W, cout)
    return bd.reshape(ks * W * cin, W * cout)


def _expand_bias(b, W):
    return jnp.tile(b, W).reshape(1, W * b.shape[0]).astype(jnp.float32)


@jax.jit
def gcn_forward(x_nchw, params):
    """Forward pass matching the PyTorch GCN module. Input/output are NCHW."""
    N, Cin, H, W = x_nchw.shape
    wl1, bl1 = params["conv_l1"]
    wl2, bl2 = params["conv_l2"]
    wr1, br1 = params["conv_r1"]
    wr2, br2 = params["conv_r2"]
    ks, _, Cp = wl1.shape
    assert ks % 2 == 1, "only odd ks matches PyTorch 'same'-size padding here"
    p = ks // 2

    # Tiny, weight-sized host-side prep (bf16 matmul operands, f32 biases).
    Wl1 = _expand_weight(wl1, W).astype(jnp.bfloat16)
    Wl2 = _expand_weight(wl2, W).astype(jnp.bfloat16)
    Wr1 = _expand_weight(wr1, W).astype(jnp.bfloat16)
    Wr2 = _expand_weight(wr2, W).astype(jnp.bfloat16)
    Bl1, Bl2, Br1, Br2 = (_expand_bias(b, W) for b in (bl1, bl2, br1, br2))

    # NCHW -> NHWC (interface cost), then a FREE reshape to (N, H, W*Cin).
    x = jnp.transpose(x_nchw, (0, 2, 3, 1)).reshape(N, H, W * Cin)

    kernel = functools.partial(_gcn_kernel, H=H, W=W, cin=Cin, cp=Cp, ks=ks)

    def const_spec(shape):
        return pl.BlockSpec(shape, lambda n: (0, 0))

    out = pl.pallas_call(
        kernel,
        out_shape=jax.ShapeDtypeStruct((N, H, W * Cp), jnp.float32),
        grid_spec=pltpu.PrefetchScalarGridSpec(
            num_scalar_prefetch=0,
            grid=(N,),
            in_specs=[
                pl.BlockSpec((1, H, W * Cin), lambda n: (n, 0, 0)),
                const_spec(Wl1.shape), const_spec(Bl1.shape),
                const_spec(Wl2.shape), const_spec(Bl2.shape),
                const_spec(Wr1.shape), const_spec(Br1.shape),
                const_spec(Wr2.shape), const_spec(Br2.shape),
            ],
            out_specs=pl.BlockSpec((1, H, W * Cp), lambda n: (n, 0, 0)),
            scratch_shapes=[
                pltpu.VMEM((H + 2 * p, W * Cin), jnp.float32),        # xh
                pltpu.VMEM((H, (W + 2 * p) * Cin), jnp.float32),      # xw
                pltpu.VMEM((H, (W + 2 * p) * Cp), jnp.float32),       # l1w
                pltpu.VMEM((H + 2 * p, W * Cp), jnp.float32),         # r1h
            ]),
        compiler_params=pltpu.CompilerParams(
            dimension_semantics=("parallel",)),
    )(x, Wl1, Bl1, Wl2, Bl2, Wr1, Br1, Wr2, Br2)

    out = out.reshape(N, H, W, Cp)
    return jnp.transpose(out, (0, 3, 1, 2))          # NHWC -> NCHW


# ---------------------------------------------------------------------------
# Parameters (PyTorch Conv2d default init), natural (ks, cin, cout) layout
# ---------------------------------------------------------------------------
def make_gcn_params(key, inplanes, planes, ks=7, dtype=jnp.float32):
    """Weights stored as (ks, cin, cout).  To port a real PyTorch checkpoint:
    (ks,1) conv: w_here = torch_w[:, :, :, 0].transpose(2, 1, 0)
    (1,ks) conv: w_here = torch_w[:, :, 0, :].transpose(2, 1, 0)."""
    def conv_init(k, cin, cout, ksize):
        kw, kb = jax.random.split(k)
        fan_in = cin * ksize
        bound = 1.0 / (fan_in ** 0.5)
        w = jax.random.uniform(kw, (ksize, cin, cout), dtype, -bound, bound)
        b = jax.random.uniform(kb, (cout,), dtype, -bound, bound)
        return w, b

    k1, k2, k3, k4 = jax.random.split(key, 4)
    return {
        "conv_l1": conv_init(k1, inplanes, planes, ks),   # (ks,1) conv
        "conv_l2": conv_init(k2, planes, planes, ks),     # (1,ks) conv
        "conv_r1": conv_init(k3, inplanes, planes, ks),   # (1,ks) conv
        "conv_r2": conv_init(k4, planes, planes, ks),     # (ks,1) conv
    }


# ---------------------------------------------------------------------------
# Pure-XLA reference (for a numerical sanity check)
# ---------------------------------------------------------------------------
def gcn_reference(x_nchw, params):
    def conv(x, w, b, direction):
        ksz = w.shape[0]
        p = ksz // 2
        if direction == "h":                         # (ks, 1) kernel
            rhs = w[:, None, :, :]                   # HWIO
            pad = ((p, p), (0, 0))
        else:                                        # (1, ks) kernel
            rhs = w[None, :, :, :]
            pad = ((0, 0), (p, p))
        y = jax.lax.conv_general_dilated(
            x, rhs, window_strides=(1, 1), padding=pad,
            dimension_numbers=("NCHW", "HWIO", "NCHW"))
        return y + b[None, :, None, None]

    wl1, bl1 = params["conv_l1"]; wl2, bl2 = params["conv_l2"]
    wr1, br1 = params["conv_r1"]; wr2, br2 = params["conv_r2"]
    xl = conv(conv(x_nchw, wl1, bl1, "h"), wl2, bl2, "w")
    xr = conv(conv(x_nchw, wr1, br1, "w"), wr2, br2, "h")
    return xl + xr


if __name__ == "__main__":
    N, Cin, H, W = 2, 4, 16, 16
    planes, ks = 8, 7

    key = jax.random.PRNGKey(0)
    kx, kp = jax.random.split(key)
    x = jax.random.normal(kx, (N, Cin, H, W), jnp.float32)
    params = make_gcn_params(kp, Cin, planes, ks)

    out = gcn_forward(x, params)
    jax.block_until_ready(out)
    assert out.shape == (N, planes, H, W), out.shape

    # sanity check vs pure-XLA conv reference (loose tol: bf16 MXU operands)
    ref = gcn_reference(x, params)
    max_err = float(jnp.max(jnp.abs(out - ref)))
    assert max_err < 5e-2, max_err

    print("KERNEL_OK")
</pallas_src>

<mosaic_0001>
module attributes {stable_mosaic.version = 11 : i64} {
  func.func @_gcn_kernel(%arg0: i32, %arg1: memref<1x16x64xf32, #tpu.memory_space<vmem>>, %arg2: memref<448x128xbf16, #tpu.memory_space<vmem>>, %arg3: memref<1x128xf32, #tpu.memory_space<vmem>>, %arg4: memref<896x128xbf16, #tpu.memory_space<vmem>>, %arg5: memref<1x128xf32, #tpu.memory_space<vmem>>, %arg6: memref<448x128xbf16, #tpu.memory_space<vmem>>, %arg7: memref<1x128xf32, #tpu.memory_space<vmem>>, %arg8: memref<896x128xbf16, #tpu.memory_space<vmem>>, %arg9: memref<1x128xf32, #tpu.memory_space<vmem>>, %arg10: memref<1x16x128xf32, #tpu.memory_space<vmem>>, %arg11: memref<22x64xf32, #tpu.memory_space<vmem>>, %arg12: memref<16x88xf32, #tpu.memory_space<vmem>>, %arg13: memref<16x176xf32, #tpu.memory_space<vmem>>, %arg14: memref<22x128xf32, #tpu.memory_space<vmem>>) attributes {dimension_semantics = [#tpu.dimension_semantics<parallel>], iteration_bounds = array<i64: 2>, scalar_prefetch = 0 : i64, scratch_operands = 4 : i64, tpu.core_type = #tpu.core_type<tc>, window_params = [{transform_indices = @transform_0, window_bounds = array<i64: 1, 16, 64>}, {pipeline_mode = #tpu.pipeline_mode<synchronous>, transform_indices = @transform_1, window_bounds = array<i64: 448, 128>}, {pipeline_mode = #tpu.pipeline_mode<synchronous>, transform_indices = @transform_2, window_bounds = array<i64: 1, 128>}, {pipeline_mode = #tpu.pipeline_mode<synchronous>, transform_indices = @transform_3, window_bounds = array<i64: 896, 128>}, {pipeline_mode = #tpu.pipeline_mode<synchronous>, transform_indices = @transform_4, window_bounds = array<i64: 1, 128>}, {pipeline_mode = #tpu.pipeline_mode<synchronous>, transform_indices = @transform_5, window_bounds = array<i64: 448, 128>}, {pipeline_mode = #tpu.pipeline_mode<synchronous>, transform_indices = @transform_6, window_bounds = array<i64: 1, 128>}, {pipeline_mode = #tpu.pipeline_mode<synchronous>, transform_indices = @transform_7, window_bounds = array<i64: 896, 128>}, {pipeline_mode = #tpu.pipeline_mode<synchronous>, transform_indices = @transform_8, window_bounds = array<i64: 1, 128>}, {transform_indices = @transform_9, window_bounds = array<i64: 1, 16, 128>}]} {
    %cst = arith.constant 0.000000e+00 : f32
    %0 = vector.broadcast %cst : f32 to vector<22x64xf32>
    %c0 = arith.constant 0 : index
    %c0_0 = arith.constant 0 : index
    %1 = vector.load %arg11[%c0, %c0_0] : memref<22x64xf32, #tpu.memory_space<vmem>>, vector<22x64xf32>
    tpu.vector_store %arg11[%c0, %c0_0], %0 {strides = array<i32>} : memref<22x64xf32, #tpu.memory_space<vmem>>, vector<22x64xf32>,
    %cst_1 = arith.constant 0.000000e+00 : f32
    %2 = vector.broadcast %cst_1 : f32 to vector<16x88xf32>
    %c0_2 = arith.constant 0 : index
    %c0_3 = arith.constant 0 : index
    %3 = vector.load %arg12[%c0_2, %c0_3] : memref<16x88xf32, #tpu.memory_space<vmem>>, vector<16x88xf32>
    tpu.vector_store %arg12[%c0_2, %c0_3], %2 {strides = array<i32>} : memref<16x88xf32, #tpu.memory_space<vmem>>, vector<16x88xf32>,
    %cst_4 = arith.constant 0.000000e+00 : f32
    %4 = vector.broadcast %cst_4 : f32 to vector<16x176xf32>
    %c0_5 = arith.constant 0 : index
    %c0_6 = arith.constant 0 : index
    %5 = vector.load %arg13[%c0_5, %c0_6] : memref<16x176xf32, #tpu.memory_space<vmem>>, vector<16x176xf32>
    tpu.vector_store %arg13[%c0_5, %c0_6], %4 {strides = array<i32>} : memref<16x176xf32, #tpu.memory_space<vmem>>, vector<16x176xf32>,
    %cst_7 = arith.constant 0.000000e+00 : f32
    %6 = vector.broadcast %cst_7 : f32 to vector<22x128xf32>
    %c0_8 = arith.constant 0 : index
    %c0_9 = arith.constant 0 : index
    %7 = vector.load %arg14[%c0_8, %c0_9] : memref<22x128xf32, #tpu.memory_space<vmem>>, vector<22x128xf32>
    tpu.vector_store %arg14[%c0_8, %c0_9], %6 {strides = array<i32>} : memref<22x128xf32, #tpu.memory_space<vmem>>, vector<22x128xf32>,
    %c0_10 = arith.constant 0 : index
    %c0_11 = arith.constant 0 : index
    %c0_12 = arith.constant 0 : index
    %8 = vector.load %arg1[%c0_10, %c0_11, %c0_12] : memref<1x16x64xf32, #tpu.memory_space<vmem>>, vector<1x16x64xf32>
    %9 = vector.shape_cast %8 : vector<1x16x64xf32> to vector<16x64xf32>
    %c3 = arith.constant 3 : index
    %c0_13 = arith.constant 0 : index
    %10 = vector.load %arg11[%c3, %c0_13] : memref<22x64xf32, #tpu.memory_space<vmem>>, vector<16x64xf32>
    tpu.vector_store %arg11[%c3, %c0_13], %9 {strides = array<i32>} : memref<22x64xf32, #tpu.memory_space<vmem>>, vector<16x64xf32>,
    %c0_14 = arith.constant 0 : index
    %c12 = arith.constant 12 : index
    %11 = vector.load %arg12[%c0_14, %c12] : memref<16x88xf32, #tpu.memory_space<vmem>>, vector<16x64xf32>
    tpu.vector_store %arg12[%c0_14, %c12], %9 {strides = array<i32>} : memref<16x88xf32, #tpu.memory_space<vmem>>, vector<16x64xf32>,
    %c0_15 = arith.constant 0 : index
    %c0_16 = arith.constant 0 : index
    %12 = vector.load %arg11[%c0_15, %c0_16] : memref<22x64xf32, #tpu.memory_space<vmem>>, vector<16x64xf32>
    %c1 = arith.constant 1 : index
    %c0_17 = arith.constant 0 : index
    %13 = vector.load %arg11[%c1, %c0_17] : memref<22x64xf32, #tpu.memory_space<vmem>>, vector<16x64xf32>
    %c2 = arith.constant 2 : index
    %c0_18 = arith.constant 0 : index
    %14 = vector.load %arg11[%c2, %c0_18] : memref<22x64xf32, #tpu.memory_space<vmem>>, vector<16x64xf32>
    %c3_19 = arith.constant 3 : index
    %c0_20 = arith.constant 0 : index
    %15 = vector.load %arg11[%c3_19, %c0_20] : memref<22x64xf32, #tpu.memory_space<vmem>>, vector<16x64xf32>
    %c4 = arith.constant 4 : index
    %c0_21 = arith.constant 0 : index
    %16 = vector.load %arg11[%c4, %c0_21] : memref<22x64xf32, #tpu.memory_space<vmem>>, vector<16x64xf32>
    %c5 = arith.constant 5 : index
    %c0_22 = arith.constant 0 : index
    %17 = vector.load %arg11[%c5, %c0_22] : memref<22x64xf32, #tpu.memory_space<vmem>>, vector<16x64xf32>
    %c6 = arith.constant 6 : index
    %c0_23 = arith.constant 0 : index
    %18 = vector.load %arg11[%c6, %c0_23] : memref<22x64xf32, #tpu.memory_space<vmem>>, vector<16x64xf32>
    %19 = tpu.concatenate %12, %13, %14, %15, %16, %17, %18 in 1 : vector<16x64xf32>, vector<16x64xf32>, vector<16x64xf32>, vector<16x64xf32>, vector<16x64xf32>, vector<16x64xf32>, vector<16x64xf32> -> vector<16x448xf32>
    %20 = arith.truncf %19 : vector<16x448xf32> to vector<16x448xbf16>
    %c0_24 = arith.constant 0 : index
    %c0_25 = arith.constant 0 : index
    %21 = vector.load %arg2[%c0_24, %c0_25] : memref<448x128xbf16, #tpu.memory_space<vmem>>, vector<448x128xbf16>
    %cst_26 = arith.constant dense<0.000000e+00> : vector<16x128xf32>
    %22 = tpu.matmul %20, %21, %cst_26 {dimension_numbers = #tpu.dot_dimension_numbers<[1], [0], [0], [1], [0, 0, 1, 1], [], []>} : vector<16x448xbf16>, vector<448x128xbf16>, vector<16x128xf32> -> vector<16x128xf32>
    %c0_27 = arith.constant 0 : index
    %c0_28 = arith.constant 0 : index
    %23 = vector.load %arg3[%c0_27, %c0_28] : memref<1x128xf32, #tpu.memory_space<vmem>>, vector<1x128xf32>
    %24 = vector.broadcast %23 : vector<1x128xf32> to vector<16x128xf32>
    %25 = arith.addf %22, %24 : vector<16x128xf32>
    %c0_29 = arith.constant 0 : index
    %c24 = arith.constant 24 : index
    %26 = vector.load %arg13[%c0_29, %c24] : memref<16x176xf32, #tpu.memory_space<vmem>>, vector<16x128xf32>
    tpu.vector_store %arg13[%c0_29, %c24], %25 {strides = array<i32>} : memref<16x176xf32, #tpu.memory_space<vmem>>, vector<16x128xf32>,
    %c0_30 = arith.constant 0 : index
    %c0_31 = arith.constant 0 : index
    %27 = vector.load %arg13[%c0_30, %c0_31] : memref<16x176xf32, #tpu.memory_space<vmem>>, vector<16x128xf32>
    %c0_32 = arith.constant 0 : index
    %c8 = arith.constant 8 : index
    %28 = vector.load %arg13[%c0_32, %c8] : memref<16x176xf32, #tpu.memory_space<vmem>>, vector<16x128xf32>
    %c0_33 = arith.constant 0 : index
    %c16 = arith.constant 16 : index
    %29 = vector.load %arg13[%c0_33, %c16] : memref<16x176xf32, #tpu.memory_space<vmem>>, vector<16x128xf32>
    %c0_34 = arith.constant 0 : index
    %c24_35 = arith.constant 24 : index
    %30 = vector.load %arg13[%c0_34, %c24_35] : memref<16x176xf32, #tpu.memory_space<vmem>>, vector<16x128xf32>
    %c0_36 = arith.constant 0 : index
    %c32 = arith.constant 32 : index
    %31 = vector.load %arg13[%c0_36, %c32] : memref<16x176xf32, #tpu.memory_space<vmem>>, vector<16x128xf32>
    %c0_37 = arith.constant 0 : index
    %c40 = arith.constant 40 : index
    %32 = vector.load %arg13[%c0_37, %c40] : memref<16x176xf32, #tpu.memory_space<vmem>>, vector<16x128xf32>
    %c0_38 = arith.constant 0 : index
    %c48 = arith.constant 48 : index
    %33 = vector.load %arg13[%c0_38, %c48] : memref<16x176xf32, #tpu.memory_space<vmem>>, vector<16x128xf32>
    %34 = tpu.concatenate %27, %28, %29, %30, %31, %32, %33 in 1 : vector<16x128xf32>, vector<16x128xf32>, vector<16x128xf32>, vector<16x128xf32>, vector<16x128xf32>, vector<16x128xf32>, vector<16x128xf32> -> vector<16x896xf32>
    %35 = arith.truncf %34 : vector<16x896xf32> to vector<16x896xbf16>
    %c0_39 = arith.constant 0 : index
    %c0_40 = arith.constant 0 : index
    %36 = vector.load %arg4[%c0_39, %c0_40] : memref<896x128xbf16, #tpu.memory_space<vmem>>, vector<896x128xbf16>
    %cst_41 = arith.constant dense<0.000000e+00> : vector<16x128xf32>
    %37 = tpu.matmul %35, %36, %cst_41 {dimension_numbers = #tpu.dot_dimension_numbers<[1], [0], [0], [1], [0, 0, 1, 1], [], []>} : vector<16x896xbf16>, vector<896x128xbf16>, vector<16x128xf32> -> vector<16x128xf32>
    %c0_42 = arith.constant 0 : index
    %c0_43 = arith.constant 0 : index
    %38 = vector.load %arg5[%c0_42, %c0_43] : memref<1x128xf32, #tpu.memory_space<vmem>>, vector<1x128xf32>
    %39 = vector.broadcast %38 : vector<1x128xf32> to vector<16x128xf32>
    %40 = arith.addf %37, %39 : vector<16x128xf32>
    %c0_44 = arith.constant 0 : index
    %c0_45 = arith.constant 0 : index
    %41 = vector.load %arg12[%c0_44, %c0_45] : memref<16x88xf32, #tpu.memory_space<vmem>>, vector<16x64xf32>
    %c0_46 = arith.constant 0 : index
    %c4_47 = arith.constant 4 : index
    %42 = vector.load %arg12[%c0_46, %c4_47] : memref<16x88xf32, #tpu.memory_space<vmem>>, vector<16x64xf32>
    %c0_48 = arith.constant 0 : index
    %c8_49 = arith.constant 8 : index
    %43 = vector.load %arg12[%c0_48, %c8_49] : memref<16x88xf32, #tpu.memory_space<vmem>>, vector<16x64xf32>
    %c0_50 = arith.constant 0 : index
    %c12_51 = arith.constant 12 : index
    %44 = vector.load %arg12[%c0_50, %c12_51] : memref<16x88xf32, #tpu.memory_space<vmem>>, vector<16x64xf32>
    %c0_52 = arith.constant 0 : index
    %c16_53 = arith.constant 16 : index
    %45 = vector.load %arg12[%c0_52, %c16_53] : memref<16x88xf32, #tpu.memory_space<vmem>>, vector<16x64xf32>
    %c0_54 = arith.constant 0 : index
    %c20 = arith.constant 20 : index
    %46 = vector.load %arg12[%c0_54, %c20] : memref<16x88xf32, #tpu.memory_space<vmem>>, vector<16x64xf32>
    %c0_55 = arith.constant 0 : index
    %c24_56 = arith.constant 24 : index
    %47 = vector.load %arg12[%c0_55, %c24_56] : memref<16x88xf32, #tpu.memory_space<vmem>>, vector<16x64xf32>
    %48 = tpu.concatenate %41, %42, %43, %44, %45, %46, %47 in 1 : vector<16x64xf32>, vector<16x64xf32>, vector<16x64xf32>, vector<16x64xf32>, vector<16x64xf32>, vector<16x64xf32>, vector<16x64xf32> -> vector<16x448xf32>
    %49 = arith.truncf %48 : vector<16x448xf32> to vector<16x448xbf16>
    %c0_57 = arith.constant 0 : index
    %c0_58 = arith.constant 0 : index
    %50 = vector.load %arg6[%c0_57, %c0_58] : memref<448x128xbf16, #tpu.memory_space<vmem>>, vector<448x128xbf16>
    %cst_59 = arith.constant dense<0.000000e+00> : vector<16x128xf32>
    %51 = tpu.matmul %49, %50, %cst_59 {dimension_numbers = #tpu.dot_dimension_numbers<[1], [0], [0], [1], [0, 0, 1, 1], [], []>} : vector<16x448xbf16>, vector<448x128xbf16>, vector<16x128xf32> -> vector<16x128xf32>
    %c0_60 = arith.constant 0 : index
    %c0_61 = arith.constant 0 : index
    %52 = vector.load %arg7[%c0_60, %c0_61] : memref<1x128xf32, #tpu.memory_space<vmem>>, vector<1x128xf32>
    %53 = vector.broadcast %52 : vector<1x128xf32> to vector<16x128xf32>
    %54 = arith.addf %51, %53 : vector<16x128xf32>
    %c3_62 = arith.constant 3 : index
    %c0_63 = arith.constant 0 : index
    %55 = vector.load %arg14[%c3_62, %c0_63] : memref<22x128xf32, #tpu.memory_space<vmem>>, vector<16x128xf32>
    tpu.vector_store %arg14[%c3_62, %c0_63], %54 {strides = array<i32>} : memref<22x128xf32, #tpu.memory_space<vmem>>, vector<16x128xf32>,
    %c0_64 = arith.constant 0 : index
    %c0_65 = arith.constant 0 : index
    %56 = vector.load %arg14[%c0_64, %c0_65] : memref<22x128xf32, #tpu.memory_space<vmem>>, vector<16x128xf32>
    %c1_66 = arith.constant 1 : index
    %c0_67 = arith.constant 0 : index
    %57 = vector.load %arg14[%c1_66, %c0_67] : memref<22x128xf32, #tpu.memory_space<vmem>>, vector<16x128xf32>
    %c2_68 = arith.constant 2 : index
    %c0_69 = arith.constant 0 : index
    %58 = vector.load %arg14[%c2_68, %c0_69] : memref<22x128xf32, #tpu.memory_space<vmem>>, vector<16x128xf32>
    %c3_70 = arith.constant 3 : index
    %c0_71 = arith.constant 0 : index
    %59 = vector.load %arg14[%c3_70, %c0_71] : memref<22x128xf32, #tpu.memory_space<vmem>>, vector<16x128xf32>
    %c4_72 = arith.constant 4 : index
    %c0_73 = arith.constant 0 : index
    %60 = vector.load %arg14[%c4_72, %c0_73] : memref<22x128xf32, #tpu.memory_space<vmem>>, vector<16x128xf32>
    %c5_74 = arith.constant 5 : index
    %c0_75 = arith.constant 0 : index
    %61 = vector.load %arg14[%c5_74, %c0_75] : memref<22x128xf32, #tpu.memory_space<vmem>>, vector<16x128xf32>
    %c6_76 = arith.constant 6 : index
    %c0_77 = arith.constant 0 : index
    %62 = vector.load %arg14[%c6_76, %c0_77] : memref<22x128xf32, #tpu.memory_space<vmem>>, vector<16x128xf32>
    %63 = tpu.concatenate %56, %57, %58, %59, %60, %61, %62 in 1 : vector<16x128xf32>, vector<16x128xf32>, vector<16x128xf32>, vector<16x128xf32>, vector<16x128xf32>, vector<16x128xf32>, vector<16x128xf32> -> vector<16x896xf32>
    %64 = arith.truncf %63 : vector<16x896xf32> to vector<16x896xbf16>
    %c0_78 = arith.constant 0 : index
    %c0_79 = arith.constant 0 : index
    %65 = vector.load %arg8[%c0_78, %c0_79] : memref<896x128xbf16, #tpu.memory_space<vmem>>, vector<896x128xbf16>
    %cst_80 = arith.constant dense<0.000000e+00> : vector<16x128xf32>
    %66 = tpu.matmul %64, %65, %cst_80 {dimension_numbers = #tpu.dot_dimension_numbers<[1], [0], [0], [1], [0, 0, 1, 1], [], []>} : vector<16x896xbf16>, vector<896x128xbf16>, vector<16x128xf32> -> vector<16x128xf32>
    %c0_81 = arith.constant 0 : index
    %c0_82 = arith.constant 0 : index
    %67 = vector.load %arg9[%c0_81, %c0_82] : memref<1x128xf32, #tpu.memory_space<vmem>>, vector<1x128xf32>
    %68 = vector.broadcast %67 : vector<1x128xf32> to vector<16x128xf32>
    %69 = arith.addf %66, %68 : vector<16x128xf32>
    %70 = arith.addf %40, %69 : vector<16x128xf32>
    %c0_83 = arith.constant 0 : index
    %c0_84 = arith.constant 0 : index
    %c0_85 = arith.constant 0 : index
    %71 = vector.load %arg10[%c0_83, %c0_84, %c0_85] : memref<1x16x128xf32, #tpu.memory_space<vmem>>, vector<1x16x128xf32>
    %72 = vector.shape_cast %71 : vector<1x16x128xf32> to vector<16x128xf32>
    %73 = vector.shape_cast %70 : vector<16x128xf32> to vector<1x16x128xf32>
    tpu.vector_store %arg10[%c0_83, %c0_84, %c0_85], %73 {strides = array<i32>} : memref<1x16x128xf32, #tpu.memory_space<vmem>>, vector<1x16x128xf32>,
    return
  }
  func.func @transform_0(%arg0: i32) -> (i32, i32, i32) {
    %c0_i32 = arith.constant 0 : i32
    %c0_i32_0 = arith.constant 0 : i32
    %c0_i32_1 = arith.constant 0 : i32
    return %arg0, %c0_i32, %c0_i32_0 : i32, i32, i32
  }
  func.func @transform_1(%arg0: i32) -> (i32, i32) {
    %c0_i32 = arith.constant 0 : i32
    %c0_i32_0 = arith.constant 0 : i32
    %c0_i32_1 = arith.constant 0 : i32
    return %c0_i32, %c0_i32_0 : i32, i32
  }
  func.func @transform_2(%arg0: i32) -> (i32, i32) {
    %c0_i32 = arith.constant 0 : i32
    %c0_i32_0 = arith.constant 0 : i32
    %c0_i32_1 = arith.constant 0 : i32
    return %c0_i32, %c0_i32_0 : i32, i32
  }
  func.func @transform_3(%arg0: i32) -> (i32, i32) {
    %c0_i32 = arith.constant 0 : i32
    %c0_i32_0 = arith.constant 0 : i32
    %c0_i32_1 = arith.constant 0 : i32
    return %c0_i32, %c0_i32_0 : i32, i32
  }
  func.func @transform_4(%arg0: i32) -> (i32, i32) {
    %c0_i32 = arith.constant 0 : i32
    %c0_i32_0 = arith.constant 0 : i32
    %c0_i32_1 = arith.constant 0 : i32
    return %c0_i32, %c0_i32_0 : i32, i32
  }
  func.func @transform_5(%arg0: i32) -> (i32, i32) {
    %c0_i32 = arith.constant 0 : i32
    %c0_i32_0 = arith.constant 0 : i32
    %c0_i32_1 = arith.constant 0 : i32
    return %c0_i32, %c0_i32_0 : i32, i32
  }
  func.func @transform_6(%arg0: i32) -> (i32, i32) {
    %c0_i32 = arith.constant 0 : i32
    %c0_i32_0 = arith.constant 0 : i32
    %c0_i32_1 = arith.constant 0 : i32
    return %c0_i32, %c0_i32_0 : i32, i32
  }
  func.func @transform_7(%arg0: i32) -> (i32, i32) {
    %c0_i32 = arith.constant 0 : i32
    %c0_i32_0 = arith.constant 0 : i32
    %c0_i32_1 = arith.constant 0 : i32
    return %c0_i32, %c0_i32_0 : i32, i32
  }
  func.func @transform_8(%arg0: i32) -> (i32, i32) {
    %c0_i32 = arith.constant 0 : i32
    %c0_i32_0 = arith.constant 0 : i32
    %c0_i32_1 = arith.constant 0 : i32
    return %c0_i32, %c0_i32_0 : i32, i32
  }
  func.func @transform_9(%arg0: i32) -> (i32, i32, i32) {
    %c0_i32 = arith.constant 0 : i32
    %c0_i32_0 = arith.constant 0 : i32
    %c0_i32_1 = arith.constant 0 : i32
    return %arg0, %c0_i32, %c0_i32_0 : i32, i32, i32
  }
}

</mosaic_0001>

<llo_original>
// kernel: tile.23
$region0: #{tile.23}
  #allocation0 [shape = 's32[1]{0}', space=sflag, size = 0x4, scoped, tag = 'scoped memory for tile.23']
  %s0 = inlined_call_operand.vmem [shape: f32[8], index: 0, kind: input, shape index: {}]
  %s1 = inlined_call_operand.vmem [shape: f32[16,8], index: 1, kind: output, shape index: {}]
  // Predicated region
  $region2: #{tile.23} parent=0 // pred_check
    _
  $region3: #{tile.23} parent=0 // pred_check_branch
    %3 = sbr.rel (0) target = $region5
  $region4: #{tile.23} parent=0 // pred_region
    _
  $region5: #{tile.23} parent=0 // pred_fallthru
    _
  %v4 = vld [vmem:[%s0] ss:$0 sm:$0xff]
  %5 = vst [vmem:[%s1] sm:$0xff] %v4
  %s6 = scalar_lea.vmem %s1, 8
  %7 = vst [vmem:[%s6] sm:$0xff] %v4

// kernel: tile.24
$region0: #{tile.24}
  %s0 = inlined_call_operand.vmem [shape: f32[16,8], index: 0, kind: input, shape index: {}]
  %s1 = inlined_call_operand.vmem [shape: f32[1,128], index: 1, kind: output, shape index: {}]
  $region1: #{tile.24} parent=0
    #allocation0 [shape = 'u8[4096]{0}', space=vmem, size = 0x1000, scoped, tag = 'scoped mem for output reshape']
    %v2 = vld [vmem:[%s0] sm:$0x1]
    %vm3 = vcmask 64512
    %4 = vst.msk [vmem:[#allocation0] sm:$0x1] %vm3, %v2
    %s5 = scalar_lea.vmem %s0, 15
    %v6 = vld [vmem:[%s5] sm:$0x1]
    %7 = vrot.lane.b32.xlu0 %v6, 120
    %v8 = vpop.permute.xlu0 %7
    %vm9 = vcmask 1048512
    %10 = vst.msk [vmem:[#allocation0] sm:$0x1] %vm9, %v8
    %s11 = scalar_lea.vmem %s0, 14
    %v12 = vld [vmem:[%s11] sm:$0x1]
    %13 = vrot.lane.b32.xlu0 %v12, 112
    %v14 = vpop.permute.xlu0 %13
    %vm15 = vcmask 982912
    %16 = vst.msk [vmem:[#allocation0] sm:$0x1] %vm15, %v14
    %s17 = scalar_lea.vmem %s0, 13
    %v18 = vld [vmem:[%s17] sm:$0x1]
    %19 = vrot.lane.b32.xlu0 %v18, 104
    %v20 = vpop.permute.xlu0 %19
    %vm21 = vcmask 917312
    %22 = vst.msk [vmem:[#allocation0] sm:$0x1] %vm21, %v20
    %s23 = scalar_lea.vmem %s0, 12
    %v24 = vld [vmem:[%s23] sm:$0x1]
    %25 = vrot.lane.b32.xlu0 %v24, 96
    %v26 = vpop.permute.xlu0 %25
    %vm27 = vcmask 851712
    %28 = vst.msk [vmem:[#allocation0] sm:$0x1] %vm27, %v26
    %s29 = scalar_lea.vmem %s0, 11
    %v30 = vld [vmem:[%s29] sm:$0x1]
    %31 = vrot.lane.b32.xlu0 %v30, 88
    %v32 = vpop.permute.xlu0 %31
    %vm33 = vcmask 786112
    %34 = vst.msk [vmem:[#allocation0] sm:$0x1] %vm33, %v32
    %s35 = scalar_lea.vmem %s0, 10
    %v36 = vld [vmem:[%s35] sm:$0x1]
    %37 = vrot.lane.b32.xlu0 %v36, 80
    %v38 = vpop.permute.xlu0 %37
    %vm39 = vcmask 720512
    %40 = vst.msk [vmem:[#allocation0] sm:$0x1] %vm39, %v38
    %s41 = scalar_lea.vmem %s0, 9
    %v42 = vld [vmem:[%s41] sm:$0x1]
    %43 = vrot.lane.b32.xlu0 %v42, 72
    %v44 = vpop.permute.xlu0 %43
    %vm45 = vcmask 654912
    %46 = vst.msk [vmem:[#allocation0] sm:$0x1] %vm45, %v44
    %s47 = scalar_lea.vmem %s0, 8
    %v48 = vld [vmem:[%s47] sm:$0x1]
    %49 = vrot.lane.b32.xlu0 %v48, 64
    %v50 = vpop.permute.xlu0 %49
    %vm51 = vcmask 589312
    %52 = vst.msk [vmem:[#allocation0] sm:$0x1] %vm51, %v50
    %s53 = scalar_lea.vmem %s0, 7
    %v54 = vld [vmem:[%s53] sm:$0x1]
    %55 = vrot.lane.b32.xlu0 %v54, 56
    %v56 = vpop.permute.xlu0 %55
    %vm57 = vcmask 523712
    %58 = vst.msk [vmem:[#allocation0] sm:$0x1] %vm57, %v56
    %s59 = scalar_lea.vmem %s0, 6
    %v60 = vld [vmem:[%s59] sm:$0x1]
    %61 = vrot.lane.b32.xlu0 %v60, 48
    %v62 = vpop.permute.xlu0 %61
    %vm63 = vcmask 458112
    %64 = vst.msk [vmem:[#allocation0] sm:$0x1] %vm63, %v62
    %s65 = scalar_lea.vmem %s0, 5
    %v66 = vld [vmem:[%s65] sm:$0x1]
    %67 = vrot.lane.b32.xlu0 %v66, 40
    %v68 = vpop.permute.xlu0 %67
    %vm69 = vcmask 392512
    %70 = vst.msk [vmem:[#allocation0] sm:$0x1] %vm69, %v68
    %s71 = scalar_lea.vmem %s0, 4
    %v72 = vld [vmem:[%s71] sm:$0x1]
    %73 = vrot.lane.b32.xlu0 %v72, 32
    %v74 = vpop.permute.xlu0 %73
    %vm75 = vcmask 326912
    %76 = vst.msk [vmem:[#allocation0] sm:$0x1] %vm75, %v74
    %s77 = scalar_lea.vmem %s0, 3
    %v78 = vld [vmem:[%s77] sm:$0x1]
    %79 = vrot.lane.b32.xlu0 %v78, 24
    %v80 = vpop.permute.xlu0 %79
    %vm81 = vcmask 261312
    %82 = vst.msk [vmem:[#allocation0] sm:$0x1] %vm81, %v80
    %s83 = scalar_lea.vmem %s0, 2
    %v84 = vld [vmem:[%s83] sm:$0x1]
    %85 = vrot.lane.b32.xlu0 %v84, 16
    %v86 = vpop.permute.xlu0 %85
    %vm87 = vcmask 195712
    %88 = vst.msk [vmem:[#allocation0] sm:$0x1] %vm87, %v86
    %s89 = scalar_lea.vmem %s0, 1
    %v90 = vld [vmem:[%s89] sm:$0x1]
    %91 = vrot.lane.b32.xlu0 %v90, 8
    %v92 = vpop.permute.xlu0 %91
    %vm93 = vcmask 130112
    %94 = vst.msk [vmem:[#allocation0] sm:$0x1] %vm93, %v92
    %s96 = sshllo.u32 0, 1
    %v98 = vld [vmem:[#allocation0] sm:%s96]
    %s99 = sshllo.u32 0, 1
    %100 = vst [vmem:[%s1] sm:%s99] %v98

// kernel: gcn_forward.1
$region0: #{gcn_forward.1}
  #allocation0 [shape = 'u32[]', space=smem, size = 0x4, offset = 0x4, fixed_abs, tag = 'smem constant byte address 0x4 - core index']
  #allocation1 [shape = 'u32[144,128]{1,0:T(1,128)}', space=vmem, size = 0x12000, scoped, tag = 'internal scratch']
  #allocation2 [shape = 'f32[22,64]{1,0:T(8,128)}', space=vmem, size = 0x3000, scoped, tag = 'scratch operand']
  #allocation3 [shape = 'f32[16,88]{1,0:T(8,128)}', space=vmem, size = 0x2000, scoped, tag = 'scratch operand']
  #allocation4 [shape = 'f32[16,176]{1,0:T(8,128)}', space=vmem, size = 0x4000, scoped, tag = 'scratch operand']
  #allocation5 [shape = 'f32[22,128]{1,0:T(8,128)}', space=vmem, size = 0x3000, scoped, tag = 'scratch operand']
  %s0 = inlined_call_operand.vmem [shape: f32[2,16,64], index: 0, kind: input, shape index: {}]
  %s1 = inlined_call_operand.vmem [shape: bf16[448,128], index: 1, kind: input, shape index: {}]
  %s2 = inlined_call_operand.vmem [shape: f32[1,128], index: 2, kind: input, shape index: {}]
  %s3 = inlined_call_operand.vmem [shape: bf16[896,128], index: 3, kind: input, shape index: {}]
  %s4 = inlined_call_operand.vmem [shape: f32[1,128], index: 4, kind: input, shape index: {}]
  %s5 = inlined_call_operand.vmem [shape: bf16[448,128], index: 5, kind: input, shape index: {}]
  %s6 = inlined_call_operand.vmem [shape: f32[1,128], index: 6, kind: input, shape index: {}]
  %s7 = inlined_call_operand.vmem [shape: bf16[896,128], index: 7, kind: input, shape index: {}]
  %s8 = inlined_call_operand.vmem [shape: f32[1,128], index: 8, kind: input, shape index: {}]
  %s9 = inlined_call_operand.vmem [shape: f32[2,16,128], index: 9, kind: output, shape index: {}]
  %s10 = sld [smem:[#allocation0]]
  $region69: #{gcn_forward.1} parent=0
    _
  %s12 = ssub.s32 1, %s10
  %s13 = scalar_select 0, %s12, %s10
  loop: start=0, step=1, limit=4
  $region2: #{gcn_forward.1} parent=0 // loop_pre_header
    _
  $region3: #{gcn_forward.1} parent=0 // loop_header
    %s15 = sphi 0, %s19
    %p16 = scmp.ge.s32.totalorder %s15, 4
    %s25 = sphi 0, %s27
    %s28 = sphi 0, %s25
    %s29 = sphi 0, %s28
    %s45 = sphi 0, %s29
    %s49 = sphi 0, %s49
    %s51 = sphi 0, %s49
    %s52 = sphi 0, %s51
    %s66 = sphi 0, %s52
    %s70 = sphi 0, %s70
    %s72 = sphi 0, %s70
    %s73 = sphi 0, %s72
    %s87 = sphi 0, %s73
    %s91 = sphi 0, %s91
    %s93 = sphi 0, %s91
    %s94 = sphi 0, %s93
    %s108 = sphi 0, %s94
    %s112 = sphi 0, %s112
    %s114 = sphi 0, %s112
    %s115 = sphi 0, %s114
    %s129 = sphi 0, %s115
    %s133 = sphi 0, %s133
    %s135 = sphi 0, %s133
    %s136 = sphi 0, %s135
    %s150 = sphi 0, %s136
    %s154 = sphi 0, %s154
    %s156 = sphi 0, %s154
    %s157 = sphi 0, %s156
    %s171 = sphi 0, %s157
    %s175 = sphi 0, %s175
    %s177 = sphi 0, %s175
    %s178 = sphi 0, %s177
    %s192 = sphi 0, %s178
    %s196 = sphi 0, %s196
    %s198 = sphi 0, %s196
    %s199 = sphi 0, %s198
    %s213 = sphi 0, %s199
    %s219 = sphi 0, %s221
    %s222 = sphi 0, %s219
    %s223 = sphi 0, %s222
    %s239 = sphi 0, %s223
  $region4: #{gcn_forward.1} parent=0 // loop_header_branch
    %18 = sbr.rel (%p16) target = $region8
  $region5: #{gcn_forward.1} parent=0 // loop_body
    %s20 = ssub.s32 %s15, 1
    %s21 = ssub.s32 %s15, 2
    %s22 = sadd.s32 %s15, 1
    %s23 = ssub.s32 %s15, %s22
    %p24 = scmp.eq.s32.totalorder %s23, 0
    %s26 = sadd.s32 %s25, 1
    %s27 = scalar_select %p24, %s25, %s26
    %p30 = pneg %p24
    %p31 = scmp.eq.s32.totalorder %s15, 1
    %p32 = por %p30, %p31
    %p33 = scmp.ne.s32.totalorder %s25, %s28
    %p34 = scmp.eq.s32.totalorder %s15, 0
    %p35 = por %p33, %p34
    %p36 = scmp.ne.s32.totalorder %s25, %s28
    %p37 = scmp.eq.s32.totalorder %s20, 1
    %p38 = por %p36, %p37
    %p39 = scmp.ne.s32.totalorder %s28, %s29
    %p40 = scmp.eq.s32.totalorder %s20, 0
    %p41 = por %p39, %p40
    %p42 = scmp.ne.s32.totalorder %s28, %s29
    %p43 = scmp.eq.s32.totalorder %s21, 1
    %p44 = por %p42, %p43
    %p46 = scmp.ne.s32.totalorder %s29, %s45
    %p47 = scmp.eq.s32.totalorder %s21, 0
    %p48 = por %p46, %p47
    %s50 = sadd.s32 %s49, 1
    %p53 = scmp.eq.s32.totalorder %s15, 1
    %p54 = scmp.ne.s32.totalorder %s49, %s51
    %p55 = scmp.eq.s32.totalorder %s15, 0
    %p56 = por %p54, %p55
    %p57 = scmp.ne.s32.totalorder %s49, %s51
    %p58 = scmp.eq.s32.totalorder %s20, 1
    %p59 = por %p57, %p58
    %p60 = scmp.ne.s32.totalorder %s51, %s52
    %p61 = scmp.eq.s32.totalorder %s20, 0
    %p62 = por %p60, %p61
    %p63 = scmp.ne.s32.totalorder %s51, %s52
    %p64 = scmp.eq.s32.totalorder %s21, 1
    %p65 = por %p63, %p64
    %p67 = scmp.ne.s32.totalorder %s52, %s66
    %p68 = scmp.eq.s32.totalorder %s21, 0
    %p69 = por %p67, %p68
    %s71 = sadd.s32 %s70, 1
    %p74 = scmp.eq.s32.totalorder %s15, 1
    %p75 = scmp.ne.s32.totalorder %s70, %s72
    %p76 = scmp.eq.s32.totalorder %s15, 0
    %p77 = por %p75, %p76
    %p78 = scmp.ne.s32.totalorder %s70, %s72
    %p79 = scmp.eq.s32.totalorder %s20, 1
    %p80 = por %p78, %p79
    %p81 = scmp.ne.s32.totalorder %s72, %s73
    %p82 = scmp.eq.s32.totalorder %s20, 0
    %p83 = por %p81, %p82
    %p84 = scmp.ne.s32.totalorder %s72, %s73
    %p85 = scmp.eq.s32.totalorder %s21, 1
    %p86 = por %p84, %p85
    %p88 = scmp.ne.s32.totalorder %s73, %s87
    %p89 = scmp.eq.s32.totalorder %s21, 0
    %p90 = por %p88, %p89
    %s92 = sadd.s32 %s91, 1
    %p95 = scmp.eq.s32.totalorder %s15, 1
    %p96 = scmp.ne.s32.totalorder %s91, %s93
    %p97 = scmp.eq.s32.totalorder %s15, 0
    %p98 = por %p96, %p97
    %p99 = scmp.ne.s32.totalorder %s91, %s93
    %p100 = scmp.eq.s32.totalorder %s20, 1
    %p101 = por %p99, %p100
    %p102 = scmp.ne.s32.totalorder %s93, %s94
    %p103 = scmp.eq.s32.totalorder %s20, 0
    %p104 = por %p102, %p103
    %p105 = scmp.ne.s32.totalorder %s93, %s94
    %p106 = scmp.eq.s32.totalorder %s21, 1
    %p107 = por %p105, %p106
    %p109 = scmp.ne.s32.totalorder %s94, %s108
    %p110 = scmp.eq.s32.totalorder %s21, 0
    %p111 = por %p109, %p110
    %s113 = sadd.s32 %s112, 1
    %p116 = scmp.eq.s32.totalorder %s15, 1
    %p117 = scmp.ne.s32.totalorder %s112, %s114
    %p118 = scmp.eq.s32.totalorder %s15, 0
    %p119 = por %p117, %p118
    %p120 = scmp.ne.s32.totalorder %s112, %s114
    %p121 = scmp.eq.s32.totalorder %s20, 1
    %p122 = por %p120, %p121
    %p123 = scmp.ne.s32.totalorder %s114, %s115
    %p124 = scmp.eq.s32.totalorder %s20, 0
    %p125 = por %p123, %p124
    %p126 = scmp.ne.s32.totalorder %s114, %s115
    %p127 = scmp.eq.s32.totalorder %s21, 1
    %p128 = por %p126, %p127
    %p130 = scmp.ne.s32.totalorder %s115, %s129
    %p131 = scmp.eq.s32.totalorder %s21, 0
    %p132 = por %p130, %p131
    %s134 = sadd.s32 %s133, 1
    %p137 = scmp.eq.s32.totalorder %s15, 1
    %p138 = scmp.ne.s32.totalorder %s133, %s135
    %p139 = scmp.eq.s32.totalorder %s15, 0
    %p140 = por %p138, %p139
    %p141 = scmp.ne.s32.totalorder %s133, %s135
    %p142 = scmp.eq.s32.totalorder %s20, 1
    %p143 = por %p141, %p142
    %p144 = scmp.ne.s32.totalorder %s135, %s136
    %p145 = scmp.eq.s32.totalorder %s20, 0
    %p146 = por %p144, %p145
    %p147 = scmp.ne.s32.totalorder %s135, %s136
    %p148 = scmp.eq.s32.totalorder %s21, 1
    %p149 = por %p147, %p148
    %p151 = scmp.ne.s32.totalorder %s136, %s150
    %p152 = scmp.eq.s32.totalorder %s21, 0
    %p153 = por %p151, %p152
    %s155 = sadd.s32 %s154, 1
    %p158 = scmp.eq.s32.totalorder %s15, 1
    %p159 = scmp.ne.s32.totalorder %s154, %s156
    %p160 = scmp.eq.s32.totalorder %s15, 0
    %p161 = por %p159, %p160
    %p162 = scmp.ne.s32.totalorder %s154, %s156
    %p163 = scmp.eq.s32.totalorder %s20, 1
    %p164 = por %p162, %p163
    %p165 = scmp.ne.s32.totalorder %s156, %s157
    %p166 = scmp.eq.s32.totalorder %s20, 0
    %p167 = por %p165, %p166
    %p168 = scmp.ne.s32.totalorder %s156, %s157
    %p169 = scmp.eq.s32.totalorder %s21, 1
    %p170 = por %p168, %p169
    %p172 = scmp.ne.s32.totalorder %s157, %s171
    %p173 = scmp.eq.s32.totalorder %s21, 0
    %p174 = por %p172, %p173
    %s176 = sadd.s32 %s175, 1
    %p179 = scmp.eq.s32.totalorder %s15, 1
    %p180 = scmp.ne.s32.totalorder %s175, %s177
    %p181 = scmp.eq.s32.totalorder %s15, 0
    %p182 = por %p180, %p181
    %p183 = scmp.ne.s32.totalorder %s175, %s177
    %p184 = scmp.eq.s32.totalorder %s20, 1
    %p185 = por %p183, %p184
    %p186 = scmp.ne.s32.totalorder %s177, %s178
    %p187 = scmp.eq.s32.totalorder %s20, 0
    %p188 = por %p186, %p187
    %p189 = scmp.ne.s32.totalorder %s177, %s178
    %p190 = scmp.eq.s32.totalorder %s21, 1
    %p191 = por %p189, %p190
    %p193 = scmp.ne.s32.totalorder %s178, %s192
    %p194 = scmp.eq.s32.totalorder %s21, 0
    %p195 = por %p193, %p194
    %s197 = sadd.s32 %s196, 1
    %p200 = scmp.eq.s32.totalorder %s15, 1
    %p201 = scmp.ne.s32.totalorder %s196, %s198
    %p202 = scmp.eq.s32.totalorder %s15, 0
    %p203 = por %p201, %p202
    %p204 = scmp.ne.s32.totalorder %s196, %s198
    %p205 = scmp.eq.s32.totalorder %s20, 1
    %p206 = por %p204, %p205
    %p207 = scmp.ne.s32.totalorder %s198, %s199
    %p208 = scmp.eq.s32.totalorder %s20, 0
    %p209 = por %p207, %p208
    %p210 = scmp.ne.s32.totalorder %s198, %s199
    %p211 = scmp.eq.s32.totalorder %s21, 1
    %p212 = por %p210, %p211
    %p214 = scmp.ne.s32.totalorder %s199, %s213
    %p215 = scmp.eq.s32.totalorder %s21, 0
    %p216 = por %p214, %p215
    %s217 = ssub.s32 %s15, %s22
    %p218 = scmp.eq.s32.totalorder %s217, 0
    %s220 = sadd.s32 %s219, 1
    %s221 = scalar_select %p218, %s219, %s220
    %p224 = pneg %p218
    %p225 = scmp.eq.s32.totalorder %s15, 1
    %p226 = por %p224, %p225
    %p227 = scmp.ne.s32.totalorder %s219, %s222
    %p228 = scmp.eq.s32.totalorder %s15, 0
    %p229 = por %p227, %p228
    %p230 = scmp.ne.s32.totalorder %s219, %s222
    %p231 = scmp.eq.s32.totalorder %s20, 1
    %p232 = por %p230, %p231
    %p233 = scmp.ne.s32.totalorder %s222, %s223
    %p234 = scmp.eq.s32.totalorder %s20, 0
    %p235 = por %p233, %p234
    %p236 = scmp.ne.s32.totalorder %s222, %s223
    %p237 = scmp.eq.s32.totalorder %s21, 1
    %p238 = por %p236, %p237
    %p240 = scmp.ne.s32.totalorder %s223, %s239
    %p241 = scmp.eq.s32.totalorder %s21, 0
    %p242 = por %p240, %p241
    %p243 = scmp.le.s32.totalorder 1, %s15
    %p244 = scmp.lt.s32.totalorder %s15, 3
    %p245 = pnand %p243, %p244
    %p246 = pneg %p245
    // Predicated region
    $region9: #{gcn_forward.1} parent=5 // pred_check
      _
    $region10: #{gcn_forward.1} parent=5 // pred_check_branch
      %248 = sbr.rel (%p245) target = $region12
    $region11: #{gcn_forward.1} parent=5 // pred_region
      %s249 = ssub.s32 %s15, 1
      // Predicated region
      $region13: #{gcn_forward.1} parent=11 // pred_check
        %p250 = pneg %p62
      $region14: #{gcn_forward.1} parent=11 // pred_check_branch
        %252 = sbr.rel (%p250) target = $region16
      $region15: #{gcn_forward.1} parent=11 // pred_region
        _
      $region16: #{gcn_forward.1} parent=11 // pred_fallthru
        _
      // Predicated region
      $region17: #{gcn_forward.1} parent=11 // pred_check
        %p253 = pneg %p83
      $region18: #{gcn_forward.1} parent=11 // pred_check_branch
        %255 = sbr.rel (%p253) target = $region20
      $region19: #{gcn_forward.1} parent=11 // pred_region
        _
      $region20: #{gcn_forward.1} parent=11 // pred_fallthru
        _
      // Predicated region
      $region21: #{gcn_forward.1} parent=11 // pred_check
        %p256 = pneg %p104
      $region22: #{gcn_forward.1} parent=11 // pred_check_branch
        %258 = sbr.rel (%p256) target = $region24
      $region23: #{gcn_forward.1} parent=11 // pred_region
        _
      $region24: #{gcn_forward.1} parent=11 // pred_fallthru
        _
      // Predicated region
      $region25: #{gcn_forward.1} parent=11 // pred_check
        %p259 = pneg %p125
      $region26: #{gcn_forward.1} parent=11 // pred_check_branch
        %261 = sbr.rel (%p259) target = $region28
      $region27: #{gcn_forward.1} parent=11 // pred_region
        _
      $region28: #{gcn_forward.1} parent=11 // pred_fallthru
        _
      // Predicated region
      $region29: #{gcn_forward.1} parent=11 // pred_check
        %p262 = pneg %p146
      $region30: #{gcn_forward.1} parent=11 // pred_check_branch
        %264 = sbr.rel (%p262) target = $region32
      $region31: #{gcn_forward.1} parent=11 // pred_region
        _
      $region32: #{gcn_forward.1} parent=11 // pred_fallthru
        _
      // Predicated region
      $region33: #{gcn_forward.1} parent=11 // pred_check
        %p265 = pneg %p167
      $region34: #{gcn_forward.1} parent=11 // pred_check_branch
        %267 = sbr.rel (%p265) target = $region36
      $region35: #{gcn_forward.1} parent=11 // pred_region
        _
      $region36: #{gcn_forward.1} parent=11 // pred_fallthru
        _
      // Predicated region
      $region37: #{gcn_forward.1} parent=11 // pred_check
        %p268 = pneg %p188
      $region38: #{gcn_forward.1} parent=11 // pred_check_branch
        %270 = sbr.rel (%p268) target = $region40
      $region39: #{gcn_forward.1} parent=11 // pred_region
        _
      $region40: #{gcn_forward.1} parent=11 // pred_fallthru
        _
      // Predicated region
      $region41: #{gcn_forward.1} parent=11 // pred_check
        %p271 = pneg %p209
      $region42: #{gcn_forward.1} parent=11 // pred_check_branch
        %273 = sbr.rel (%p271) target = $region44
      $region43: #{gcn_forward.1} parent=11 // pred_region
        _
      $region44: #{gcn_forward.1} parent=11 // pred_fallthru
        _
    $region12: #{gcn_forward.1} parent=5 // pred_fallthru
      _
    %p274 = scmp.lt.s32.totalorder %s15, 2
    // Predicated region
    $region45: #{gcn_forward.1} parent=5 // pred_check
      %p275 = pneg %p274
    $region46: #{gcn_forward.1} parent=5 // pred_check_branch
      %277 = sbr.rel (%p275) target = $region48
    $region47: #{gcn_forward.1} parent=5 // pred_region
      // Predicated region
      $region49: #{gcn_forward.1} parent=47 // pred_check
        %p278 = pneg %p35
      $region50: #{gcn_forward.1} parent=47 // pred_check_branch
        %280 = sbr.rel (%p278) target = $region52
      $region51: #{gcn_forward.1} parent=47 // pred_region
        %p281 = scmp.lt.s32.totalorder %s15, 1
        %s282 = scalar_select %p281, %s15, 1
        %s283 = smul.addr %s282, 2
        %s284 = smul.addr %s283, 8
        %s285 = scalar_lea.vmem %s0, %s284
      $region52: #{gcn_forward.1} parent=47 // pred_fallthru
        _
    $region48: #{gcn_forward.1} parent=5 // pred_fallthru
      _
    %p286 = scmp.le.s32.totalorder 1, %s15
    %p287 = scmp.lt.s32.totalorder %s15, 3
    %p288 = pnand %p286, %p287
    %p289 = pneg %p288
    // Predicated region
    $region53: #{gcn_forward.1} parent=5 // pred_check
      _
    $region54: #{gcn_forward.1} parent=5 // pred_check_branch
      %291 = sbr.rel (%p288) target = $region56
    $region55: #{gcn_forward.1} parent=5 // pred_region
      %s292 = ssub.s32 %s15, 1
      %p293 = scmp.lt.s32.totalorder %s20, 1
      %s294 = scalar_select %p293, %s20, 1
      %s295 = smul.addr %s294, 2
      %s296 = smul.addr %s295, 8
      %s297 = scalar_lea.vmem %s0, %s296
      %p298 = pneg %p41
      %p299 = pneg %p38
      %p300 = pneg %p62
      %p301 = pneg %p59
      %p302 = pneg %p83
      %p303 = pneg %p80
      %p304 = pneg %p104
      %p305 = pneg %p101
      %p306 = pneg %p125
      %p307 = pneg %p122
      %p308 = pneg %p146
      %p309 = pneg %p143
      %p310 = pneg %p167
      %p311 = pneg %p164
      %p312 = pneg %p188
      %p313 = pneg %p185
      %p314 = pneg %p209
      %p315 = pneg %p206
      %p316 = pneg %p235
      %p317 = pneg %p232
      %p318 = scmp.lt.s32.totalorder %s20, 1
      %s319 = scalar_select %p318, %s20, 1
      %s320 = smul.addr %s319, 2
      %s321 = smul.addr %s320, 8
      %s322 = scalar_lea.vmem %s9, %s321
      %p323 = scmp.lt.s32.totalorder %s20, 1
      %s324 = scalar_select %p323, %s20, 1
      %s325 = smul.addr %s324, 2
      %s326 = smul.addr %s325, 8
      %s327 = scalar_lea.vmem %s0, %s326
      %p328 = scmp.lt.s32.totalorder %s20, 1
      %s329 = scalar_select %p328, %s20, 1
      %s330 = smul.addr %s329, 2
      %s331 = smul.addr %s330, 8
      %s332 = scalar_lea.vmem %s9, %s331
      %vm334 = vcmask 523264
      %335 = vst.msk [vmem:[#allocation2] sm:$0xff] %vm334, 0.0
      %336 = vst.msk [vmem:[#allocation2 + $0x8] sm:$0xff] %vm334, 0.0
      %vm337 = vcmask 521216
      %338 = vst.msk [vmem:[#allocation2 + $0x10] sm:$0x3f] %vm337, 0.0
      %vm339 = vcmask 719872
      %340 = vst.msk [vmem:[#allocation3] sm:$0xff] %vm339, 0.0
      %341 = vst.msk [vmem:[#allocation3 + $0x8] sm:$0xff] %vm339, 0.0
      %342 = vst [vmem:[#allocation4] sm:$0xff] 0.0
      %vm343 = vcmask 392192
      %344 = vst.msk [vmem:[#allocation4 + $0x8] sm:$0xff] %vm343, 0.0
      %345 = vst [vmem:[#allocation4 + $0x10] sm:$0xff] 0.0
      %346 = vst.msk [vmem:[#allocation4 + $0x18] sm:$0xff] %vm343, 0.0
      %347 = vst [vmem:[#allocation5] sm:$0xff] 0.0
      %348 = vst [vmem:[#allocation5 + $0x8] sm:$0xff] 0.0
      %349 = vst [vmem:[#allocation5 + $0x10] sm:$0x3f] 0.0
      %v350 = vld [vmem:[%s327] sm:$0xff]
      %v351 = vld [vmem:[%s327 + $0x8] sm:$0xff]
      %352 = vst.msk [vmem:[#allocation2 + $0x3] sm:$0xff] %vm334, %v350
      %353 = vst.msk [vmem:[#allocation2 + $0xb] sm:$0xff] %vm334, %v351
      %356 = vrot.lane.b32.xlu0 %v350, 12
      %v357 = vpop.permute.xlu0 %356
      %358 = vrot.lane.b32.xlu0 %v351, 12
      %v359 = vpop.permute.xlu0 %358
      %vm362 = vcmask 621664
      %363 = vst.msk [vmem:[#allocation3] sm:$0xff] %vm362, %v357
      %364 = vst.msk [vmem:[#allocation3 + $0x8] sm:$0xff] %vm362, %v359
      %v365 = vld [vmem:[#allocation2] sm:$0xff]
      %v366 = vld [vmem:[#allocation2 + $0x8] sm:$0xff]
      %v367 = vld [vmem:[#allocation2 + $0x1] sm:$0xff]
      %v368 = vld [vmem:[#allocation2 + $0x9] sm:$0xff]
      %v369 = vld [vmem:[#allocation2 + $0x2] sm:$0xff]
      %v370 = vld [vmem:[#allocation2 + $0xa] sm:$0xff]
      %v371 = vld [vmem:[#allocation2 + $0x3] sm:$0xff]
      %v372 = vld [vmem:[#allocation2 + $0xb] sm:$0xff]
      %v373 = vld [vmem:[#allocation2 + $0x4] sm:$0xff]
      %v374 = vld [vmem:[#allocation2 + $0xc] sm:$0xff]
      %v375 = vld [vmem:[#allocation2 + $0x5] sm:$0xff]
      %v376 = vld [vmem:[#allocation2 + $0xd] sm:$0xff]
      %v377 = vld [vmem:[#allocation2 + $0x6] sm:$0xff]
      %v378 = vld [vmem:[#allocation2 + $0xe] sm:$0xff]
      %381 = vrot.lane.b32.xlu0 %v367, 64
      %v382 = vpop.permute.xlu0 %381
      %383 = vrot.lane.b32.xlu0 %v368, 64
      %v384 = vpop.permute.xlu0 %383
      %389 = vrot.lane.b32.xlu0 %v371, 64
      %v390 = vpop.permute.xlu0 %389
      %391 = vrot.lane.b32.xlu0 %v372, 64
      %v392 = vpop.permute.xlu0 %391
      %397 = vrot.lane.b32.xlu0 %v375, 64
      %v398 = vpop.permute.xlu0 %397
      %399 = vrot.lane.b32.xlu0 %v376, 64
      %v400 = vpop.permute.xlu0 %399
      %v403 = vsel %vm334, %v365, %v382
      %v404 = vsel %vm334, %v366, %v384
      %v405 = vsel %vm334, %v369, %v390
      %v406 = vsel %vm334, %v370, %v392
      %v407 = vsel %vm334, %v373, %v398
      %v408 = vsel %vm334, %v374, %v400
      %v409 = vpack.c.bf16 %v404, %v403
      %v410 = vpack.c.bf16 %v406, %v405
      %v411 = vpack.c.bf16 %v408, %v407
      %v412 = vpack.c.bf16 %v378, %v377
      %v413 = vld [vmem:[%s1] sm:$0xf]
      %v414 = vld [vmem:[%s1 + $0x4] sm:$0xf]
      %v415 = vld [vmem:[%s1 + $0x8] sm:$0xf]
      %v416 = vld [vmem:[%s1 + $0xc] sm:$0xf]
      %v417 = vld [vmem:[%s1 + $0x10] sm:$0xf]
      %v418 = vld [vmem:[%s1 + $0x14] sm:$0xf]
      %v419 = vld [vmem:[%s1 + $0x18] sm:$0xf]
      %v420 = vld [vmem:[%s1 + $0x1c] sm:$0xf]
      %v421 = vld [vmem:[%s1 + $0x20] sm:$0xf]
      %v422 = vld [vmem:[%s1 + $0x24] sm:$0xf]
      %v423 = vld [vmem:[%s1 + $0x28] sm:$0xf]
      %v424 = vld [vmem:[%s1 + $0x2c] sm:$0xf]
      %v425 = vld [vmem:[%s1 + $0x30] sm:$0xf]
      %v426 = vld [vmem:[%s1 + $0x34] sm:$0xf]
      %v427 = vld [vmem:[%s1 + $0x38] sm:$0xf]
      %v428 = vld [vmem:[%s1 + $0x3c] sm:$0xf]
      %v429 = vld [vmem:[%s1 + $0x40] sm:$0xf]
      %v430 = vld [vmem:[%s1 + $0x44] sm:$0xf]
      %v431 = vld [vmem:[%s1 + $0x48] sm:$0xf]
      %v432 = vld [vmem:[%s1 + $0x4c] sm:$0xf]
      %v433 = vld [vmem:[%s1 + $0x50] sm:$0xf]
      %v434 = vld [vmem:[%s1 + $0x54] sm:$0xf]
      %v435 = vld [vmem:[%s1 + $0x58] sm:$0xf]
      %v436 = vld [vmem:[%s1 + $0x5c] sm:$0xf]
      %v437 = vld [vmem:[%s1 + $0x60] sm:$0xf]
      %v438 = vld [vmem:[%s1 + $0x64] sm:$0xf]
      %v439 = vld [vmem:[%s1 + $0x68] sm:$0xf]
      %v440 = vld [vmem:[%s1 + $0x6c] sm:$0xf]
      %v441 = vld [vmem:[%s1 + $0x70] sm:$0xf]
      %v442 = vld [vmem:[%s1 + $0x74] sm:$0xf]
      %v443 = vld [vmem:[%s1 + $0x78] sm:$0xf]
      %v444 = vld [vmem:[%s1 + $0x7c] sm:$0xf]
      %v445 = vld [vmem:[%s1 + $0x80] sm:$0xf]
      %v446 = vld [vmem:[%s1 + $0x84] sm:$0xf]
      %v447 = vld [vmem:[%s1 + $0x88] sm:$0xf]
      %v448 = vld [vmem:[%s1 + $0x8c] sm:$0xf]
      %v449 = vld [vmem:[%s1 + $0x90] sm:$0xf]
      %v450 = vld [vmem:[%s1 + $0x94] sm:$0xf]
      %v451 = vld [vmem:[%s1 + $0x98] sm:$0xf]
      %v452 = vld [vmem:[%s1 + $0x9c] sm:$0xf]
      %v453 = vld [vmem:[%s1 + $0xa0] sm:$0xf]
      %v454 = vld [vmem:[%s1 + $0xa4] sm:$0xf]
      %v455 = vld [vmem:[%s1 + $0xa8] sm:$0xf]
      %v456 = vld [vmem:[%s1 + $0xac] sm:$0xf]
      %v457 = vld [vmem:[%s1 + $0xb0] sm:$0xf]
      %v458 = vld [vmem:[%s1 + $0xb4] sm:$0xf]
      %v459 = vld [vmem:[%s1 + $0xb8] sm:$0xf]
      %v460 = vld [vmem:[%s1 + $0xbc] sm:$0xf]
      %v461 = vld [vmem:[%s1 + $0xc0] sm:$0xf]
      %v462 = vld [vmem:[%s1 + $0xc4] sm:$0xf]
      %v463 = vld [vmem:[%s1 + $0xc8] sm:$0xf]
      %v464 = vld [vmem:[%s1 + $0xcc] sm:$0xf]
      %v465 = vld [vmem:[%s1 + $0xd0] sm:$0xf]
      %v466 = vld [vmem:[%s1 + $0xd4] sm:$0xf]
      %v467 = vld [vmem:[%s1 + $0xd8] sm:$0xf]
      %v468 = vld [vmem:[%s1 + $0xdc] sm:$0xf]
      %v469 = vld [vmem:[%s2] sm:$0x1]
      %v471 = vlaneseq
      %v472 = vshrl.u32 %v471, 7
      %v473 = vsub.s32 0, %v472
      %v474 = vrot.slane %v469, %v473
      %v532 = vunpack.c.l.b16 %v413
      %v533 = vunpack.c.l.b16 %v414
      %v534 = vunpack.c.l.b16 %v415
      %v535 = vunpack.c.l.b16 %v416
      %v536 = vunpack.c.l.b16 %v417
      %v537 = vunpack.c.l.b16 %v418
      %v538 = vunpack.c.l.b16 %v419
      %v539 = vunpack.c.l.b16 %v420
      %v540 = vunpack.c.l.b16 %v421
      %v541 = vunpack.c.l.b16 %v422
      %v542 = vunpack.c.l.b16 %v423
      %v543 = vunpack.c.l.b16 %v424
      %v544 = vunpack.c.l.b16 %v425
      %v545 = vunpack.c.l.b16 %v426
      %v546 = vunpack.c.l.b16 %v427
      %v547 = vunpack.c.l.b16 %v428
      %v548 = vunpack.c.l.b16 %v429
      %v549 = vunpack.c.l.b16 %v430
      %v550 = vunpack.c.l.b16 %v431
      %v551 = vunpack.c.l.b16 %v432
      %v552 = vunpack.c.l.b16 %v433
      %v553 = vunpack.c.l.b16 %v434
      %v554 = vunpack.c.l.b16 %v435
      %v555 = vunpack.c.l.b16 %v436
      %v556 = vunpack.c.l.b16 %v437
      %v557 = vunpack.c.l.b16 %v438
      %v558 = vunpack.c.l.b16 %v439
      %v559 = vunpack.c.l.b16 %v440
      %v560 = vunpack.c.l.b16 %v441
      %v561 = vunpack.c.l.b16 %v442
      %v562 = vunpack.c.l.b16 %v443
      %v563 = vunpack.c.l.b16 %v444
      %v564 = vunpack.c.l.b16 %v445
      %v565 = vunpack.c.l.b16 %v446
      %v566 = vunpack.c.l.b16 %v447
      %v567 = vunpack.c.l.b16 %v448
      %v568 = vunpack.c.l.b16 %v449
      %v569 = vunpack.c.l.b16 %v450
      %v570 = vunpack.c.l.b16 %v451
      %v571 = vunpack.c.l.b16 %v452
      %v572 = vunpack.c.l.b16 %v453
      %v573 = vunpack.c.l.b16 %v454
      %v574 = vunpack.c.l.b16 %v455
      %v575 = vunpack.c.l.b16 %v456
      %v576 = vunpack.c.l.b16 %v457
      %v577 = vunpack.c.l.b16 %v458
      %v578 = vunpack.c.l.b16 %v459
      %v579 = vunpack.c.l.b16 %v460
      %v580 = vunpack.c.l.b16 %v461
      %v581 = vunpack.c.l.b16 %v462
      %v582 = vunpack.c.l.b16 %v463
      %v583 = vunpack.c.l.b16 %v464
      %v584 = vunpack.c.l.b16 %v465
      %v585 = vunpack.c.l.b16 %v466
      %v586 = vunpack.c.l.b16 %v467
      %v587 = vunpack.c.l.b16 %v468
      %v588 = vpack.c.b16 %v533, %v532
      %v589 = vpack.c.b16 %v535, %v534
      %v590 = vpack.c.b16 %v537, %v536
      %v591 = vpack.c.b16 %v539, %v538
      %v592 = vpack.c.b16 %v541, %v540
      %v593 = vpack.c.b16 %v543, %v542
      %v594 = vpack.c.b16 %v545, %v544
      %v595 = vpack.c.b16 %v547, %v546
      %v596 = vpack.c.b16 %v549, %v548
      %v597 = vpack.c.b16 %v551, %v550
      %v598 = vpack.c.b16 %v553, %v552
      %v599 = vpack.c.b16 %v555, %v554
      %v600 = vpack.c.b16 %v557, %v556
      %v601 = vpack.c.b16 %v559, %v558
      %v602 = vpack.c.b16 %v561, %v560
      %v603 = vpack.c.b16 %v563, %v562
      %v604 = vpack.c.b16 %v565, %v564
      %v605 = vpack.c.b16 %v567, %v566
      %v606 = vpack.c.b16 %v569, %v568
      %v607 = vpack.c.b16 %v571, %v570
      %v608 = vpack.c.b16 %v573, %v572
      %v609 = vpack.c.b16 %v575, %v574
      %v610 = vpack.c.b16 %v577, %v576
      %v611 = vpack.c.b16 %v579, %v578
      %v612 = vpack.c.b16 %v581, %v580
      %v613 = vpack.c.b16 %v583, %v582
      %v614 = vpack.c.b16 %v585, %v584
      %v615 = vpack.c.b16 %v587, %v586
      %v645 = vsel %vm334, %v412, 0
      %647 = vmatprep.subr.bf16.mxu0 0
      %648 = vmatpush1.bf16.msra.mxu0 %v588
      %649 = vmatprep.subr.bf16.mxu0 0
      %650 = vmatpush1.bf16.msra.mxu0 %v589
      %651 = vmatprep.subr.bf16.mxu0 0
      %652 = vmatpush1.bf16.msra.mxu0 %v590
      %653 = vmatprep.subr.bf16.mxu0 0
      %654 = vmatpush1.bf16.msra.mxu0 %v591
      %655 = vmatprep.subr.bf16.mxu0 0
      %656 = vmatpush1.bf16.msra.mxu0 %v592
      %657 = vmatprep.subr.bf16.mxu0 0
      %658 = vmatpush1.bf16.msra.mxu0 %v593
      %659 = vmatprep.subr.bf16.mxu0 0
      %660 = vmatpush1.bf16.msra.mxu0 %v594
      %661 = vmatprep.subr.bf16.mxu0 0
      %662 = vmatpush1.bf16.msra.mxu0 %v595
      %663 = vmatprep.subr.bf16.mxu0 0
      %664 = vmatpush1.bf16.msra.mxu0 %v596
      %665 = vmatprep.subr.bf16.mxu0 0
      %666 = vmatpush1.bf16.msra.mxu0 %v597
      %667 = vmatprep.subr.bf16.mxu0 0
      %668 = vmatpush1.bf16.msra.mxu0 %v598
      %669 = vmatprep.subr.bf16.mxu0 0
      %670 = vmatpush1.bf16.msra.mxu0 %v599
      %671 = vmatprep.subr.bf16.mxu0 0
      %672 = vmatpush1.bf16.msra.mxu0 %v600
      %673 = vmatprep.subr.bf16.mxu0 0
      %674 = vmatpush1.bf16.msra.mxu0 %v601
      %675 = vmatprep.subr.bf16.mxu0 0
      %676 = vmatpush1.bf16.msra.mxu0 %v602
      %677 = vmatprep.subr.bf16.mxu0 0
      %678 = vmatpush1.bf16.msra.mxu0 %v603
      %679 = vmatprep.mubr.bf16.mxu0 %v410
      %680 = vmatmul.mubr.bf16.gmra.mrb[0].mxu0 %v409
      %v681 = vpop.f32.mrb[0].mxu0
      %v682 = vadd.f32 %v474, %v681
      %v683 = vpop.f32.mrb[0].mxu0
      %v684 = vpop.f32.mrb[0].mxu0
      %v685 = vadd.f32 %v474, %v684
      %v686 = vpop.f32.mrb[0].mxu0
      %687 = vdwg.mxu0
      %688 = vmatprep.subr.bf16.mxu0 0
      %689 = vmatpush1.bf16.msra.mxu0 %v604
      %690 = vmatprep.subr.bf16.mxu0 0
      %691 = vmatpush1.bf16.msra.mxu0 %v605
      %692 = vmatprep.subr.bf16.mxu0 0
      %693 = vmatpush1.bf16.msra.mxu0 %v606
      %694 = vmatprep.subr.bf16.mxu0 0
      %695 = vmatpush1.bf16.msra.mxu0 %v607
      %696 = vmatprep.subr.bf16.mxu0 0
      %697 = vmatpush1.bf16.msra.mxu0 %v608
      %698 = vmatprep.subr.bf16.mxu0 0
      %699 = vmatpush1.bf16.msra.mxu0 %v609
      %700 = vmatprep.subr.bf16.mxu0 0
      %701 = vmatpush1.bf16.msra.mxu0 %v610
      %702 = vmatprep.subr.bf16.mxu0 0
      %703 = vmatpush1.bf16.msra.mxu0 %v611
      %704 = vmatprep.subr.bf16.mxu0 0
      %705 = vmatpush1.bf16.msra.mxu0 %v612
      %706 = vmatprep.subr.bf16.mxu0 0
      %707 = vmatpush1.bf16.msra.mxu0 %v613
      %708 = vmatprep.subr.bf16.mxu0 0
      %709 = vmatpush1.bf16.msra.mxu0 %v614
      %710 = vmatprep.subr.bf16.mxu0 0
      %711 = vmatpush1.bf16.msra.mxu0 %v615
      %712 = vmatprep.subr.bf16.mxu0 0
      %713 = vmatpush1.bf16.msra.mxu0 0
      %714 = vmatprep.subr.bf16.mxu0 0
      %715 = vmatpush1.bf16.msra.mxu0 0
      %716 = vmatprep.subr.bf16.mxu0 0
      %717 = vmatpush1.bf16.msra.mxu0 0
      %718 = vmatprep.subr.bf16.mxu0 0
      %719 = vmatpush1.bf16.msra.mxu0 0
      %720 = vmatprep.mubr.bf16.mxu0 %v645
      %721 = vmatmul.mubr.bf16.gmra.mrb[0].mxu0 %v411
      %v722 = vpop.f32.mrb[0].mxu0
      %v723 = vadd.f32 %v682, %v722
      %v724 = vpop.f32.mrb[0].mxu0
      %v725 = vpop.f32.mrb[0].mxu0
      %v726 = vadd.f32 %v685, %v725
      %v727 = vpop.f32.mrb[0].mxu0
      %728 = vdwg.mxu0
      %731 = vrot.lane.b32.xlu0 %v723, 24
      %v732 = vpop.permute.xlu0 %731
      %733 = vrot.lane.b32.xlu0 %v726, 24
      %v734 = vpop.permute.xlu0 %733
      %vm737 = vcmask 1047744
      %738 = vst.msk [vmem:[#allocation4] sm:$0xff] %vm737, %v732
      %vm739 = vcmask 195584
      %740 = vst.msk [vmem:[#allocation4 + $0x8] sm:$0xff] %vm739, %v732
      %741 = vst.msk [vmem:[#allocation4 + $0x10] sm:$0xff] %vm737, %v734
      %742 = vst.msk [vmem:[#allocation4 + $0x18] sm:$0xff] %vm739, %v734
      %v743 = vld [vmem:[#allocation4] sm:$0xff]
      %v744 = vld [vmem:[#allocation4 + $0x10] sm:$0xff]
      %v745 = vld [vmem:[#allocation4 + $0x8] sm:$0xff]
      %v746 = vld [vmem:[#allocation4 + $0x18] sm:$0xff]
      %751 = vrot.lane.b32.xlu0 %v743, 120
      %v752 = vpop.permute.xlu0 %751
      %753 = vrot.lane.b32.xlu0 %v745, 120
      %v754 = vpop.permute.xlu0 %753
      %755 = vrot.lane.b32.xlu0 %v744, 120
      %v756 = vpop.permute.xlu0 %755
      %757 = vrot.lane.b32.xlu0 %v746, 120
      %v758 = vpop.permute.xlu0 %757
      %vm759 = vcmask 982016
      %v760 = vsel %vm759, %v752, %v754
      %v761 = vsel %vm759, %v756, %v758
      %764 = vrot.lane.b32.xlu0 %v743, 112
      %v765 = vpop.permute.xlu0 %764
      %766 = vrot.lane.b32.xlu0 %v745, 112
      %v767 = vpop.permute.xlu0 %766
      %768 = vrot.lane.b32.xlu0 %v744, 112
      %v769 = vpop.permute.xlu0 %768
      %770 = vrot.lane.b32.xlu0 %v746, 112
      %v771 = vpop.permute.xlu0 %770
      %vm772 = vcmask 916480
      %v773 = vsel %vm772, %v765, %v767
      %v774 = vsel %vm772, %v769, %v771
      %777 = vrot.lane.b32.xlu0 %v743, 104
      %v778 = vpop.permute.xlu0 %777
      %779 = vrot.lane.b32.xlu0 %v745, 104
      %v780 = vpop.permute.xlu0 %779
      %781 = vrot.lane.b32.xlu0 %v744, 104
      %v782 = vpop.permute.xlu0 %781
      %783 = vrot.lane.b32.xlu0 %v746, 104
      %v784 = vpop.permute.xlu0 %783
      %vm785 = vcmask 850944
      %v786 = vsel %vm785, %v778, %v780
      %v787 = vsel %vm785, %v782, %v784
      %790 = vrot.lane.b32.xlu0 %v743, 96
      %v791 = vpop.permute.xlu0 %790
      %792 = vrot.lane.b32.xlu0 %v745, 96
      %v793 = vpop.permute.xlu0 %792
      %794 = vrot.lane.b32.xlu0 %v744, 96
      %v795 = vpop.permute.xlu0 %794
      %796 = vrot.lane.b32.xlu0 %v746, 96
      %v797 = vpop.permute.xlu0 %796
      %vm798 = vcmask 785408
      %v799 = vsel %vm798, %v791, %v793
      %v800 = vsel %vm798, %v795, %v797
      %803 = vrot.lane.b32.xlu0 %v743, 88
      %v804 = vpop.permute.xlu0 %803
      %805 = vrot.lane.b32.xlu0 %v745, 88
      %v806 = vpop.permute.xlu0 %805
      %807 = vrot.lane.b32.xlu0 %v744, 88
      %v808 = vpop.permute.xlu0 %807
      %809 = vrot.lane.b32.xlu0 %v746, 88
      %v810 = vpop.permute.xlu0 %809
      %v811 = vsel %vm339, %v804, %v806
      %v812 = vsel %vm339, %v808, %v810
      %815 = vrot.lane.b32.xlu0 %v743, 80
      %v816 = vpop.permute.xlu0 %815
      %817 = vrot.lane.b32.xlu0 %v745, 80
      %v818 = vpop.permute.xlu0 %817
      %819 = vrot.lane.b32.xlu0 %v744, 80
      %v820 = vpop.permute.xlu0 %819
      %821 = vrot.lane.b32.xlu0 %v746, 80
      %v822 = vpop.permute.xlu0 %821
      %vm823 = vcmask 654336
      %v824 = vsel %vm823, %v816, %v818
      %v825 = vsel %vm823, %v820, %v822
      %v828 = vpack.c.bf16 %v744, %v743
      %v829 = vpack.c.bf16 %v761, %v760
      %v830 = vpack.c.bf16 %v774, %v773
      %v831 = vpack.c.bf16 %v787, %v786
      %v832 = vpack.c.bf16 %v800, %v799
      %v833 = vpack.c.bf16 %v812, %v811
      %v834 = vpack.c.bf16 %v825, %v824
      %v835 = vld [vmem:[%s3] sm:$0xf]
      %v836 = vld [vmem:[%s3 + $0x4] sm:$0xf]
      %v837 = vld [vmem:[%s3 + $0x8] sm:$0xf]
      %v838 = vld [vmem:[%s3 + $0xc] sm:$0xf]
      %v839 = vld [vmem:[%s3 + $0x10] sm:$0xf]
      %v840 = vld [vmem:[%s3 + $0x14] sm:$0xf]
      %v841 = vld [vmem:[%s3 + $0x18] sm:$0xf]
      %v842 = vld [vmem:[%s3 + $0x1c] sm:$0xf]
      %v843 = vld [vmem:[%s3 + $0x20] sm:$0xf]
      %v844 = vld [vmem:[%s3 + $0x24] sm:$0xf]
      %v845 = vld [vmem:[%s3 + $0x28] sm:$0xf]
      %v846 = vld [vmem:[%s3 + $0x2c] sm:$0xf]
      %v847 = vld [vmem:[%s3 + $0x30] sm:$0xf]
      %v848 = vld [vmem:[%s3 + $0x34] sm:$0xf]
      %v849 = vld [vmem:[%s3 + $0x38] sm:$0xf]
      %v850 = vld [vmem:[%s3 + $0x3c] sm:$0xf]
      %v851 = vld [vmem:[%s3 + $0x40] sm:$0xf]
      %v852 = vld [vmem:[%s3 + $0x44] sm:$0xf]
      %v853 = vld [vmem:[%s3 + $0x48] sm:$0xf]
      %v854 = vld [vmem:[%s3 + $0x4c] sm:$0xf]
      %v855 = vld [vmem:[%s3 + $0x50] sm:$0xf]
      %v856 = vld [vmem:[%s3 + $0x54] sm:$0xf]
      %v857 = vld [vmem:[%s3 + $0x58] sm:$0xf]
      %v858 = vld [vmem:[%s3 + $0x5c] sm:$0xf]
      %v859 = vld [vmem:[%s3 + $0x60] sm:$0xf]
      %v860 = vld [vmem:[%s3 + $0x64] sm:$0xf]
      %v861 = vld [vmem:[%s3 + $0x68] sm:$0xf]
      %v862 = vld [vmem:[%s3 + $0x6c] sm:$0xf]
      %v863 = vld [vmem:[%s3 + $0x70] sm:$0xf]
      %v864 = vld [vmem:[%s3 + $0x74] sm:$0xf]
      %v865 = vld [vmem:[%s3 + $0x78] sm:$0xf]
      %v866 = vld [vmem:[%s3 + $0x7c] sm:$0xf]
      %v867 = vld [vmem:[%s3 + $0x80] sm:$0xf]
      %v868 = vld [vmem:[%s3 + $0x84] sm:$0xf]
      %v869 = vld [vmem:[%s3 + $0x88] sm:$0xf]
      %v870 = vld [vmem:[%s3 + $0x8c] sm:$0xf]
      %v871 = vld [vmem:[%s3 + $0x90] sm:$0xf]
      %v872 = vld [vmem:[%s3 + $0x94] sm:$0xf]
      %v873 = vld [vmem:[%s3 + $0x98] sm:$0xf]
      %v874 = vld [vmem:[%s3 + $0x9c] sm:$0xf]
      %v875 = vld [vmem:[%s3 + $0xa0] sm:$0xf]
      %v876 = vld [vmem:[%s3 + $0xa4] sm:$0xf]
      %v877 = vld [vmem:[%s3 + $0xa8] sm:$0xf]
      %v878 = vld [vmem:[%s3 + $0xac] sm:$0xf]
      %v879 = vld [vmem:[%s3 + $0xb0] sm:$0xf]
      %v880 = vld [vmem:[%s3 + $0xb4] sm:$0xf]
      %v881 = vld [vmem:[%s3 + $0xb8] sm:$0xf]
      %v882 = vld [vmem:[%s3 + $0xbc] sm:$0xf]
      %v883 = vld [vmem:[%s3 + $0xc0] sm:$0xf]
      %v884 = vld [vmem:[%s3 + $0xc4] sm:$0xf]
      %v885 = vld [vmem:[%s3 + $0xc8] sm:$0xf]
      %v886 = vld [vmem:[%s3 + $0xcc] sm:$0xf]
      %v887 = vld [vmem:[%s3 + $0xd0] sm:$0xf]
      %v888 = vld [vmem:[%s3 + $0xd4] sm:$0xf]
      %v889 = vld [vmem:[%s3 + $0xd8] sm:$0xf]
      %v890 = vld [vmem:[%s3 + $0xdc] sm:$0xf]
      %v891 = vld [vmem:[%s3 + $0xe0] sm:$0xf]
      %v892 = vld [vmem:[%s3 + $0xe4] sm:$0xf]
      %v893 = vld [vmem:[%s3 + $0xe8] sm:$0xf]
      %v894 = vld [vmem:[%s3 + $0xec] sm:$0xf]
      %v895 = vld [vmem:[%s3 + $0xf0] sm:$0xf]
      %v896 = vld [vmem:[%s3 + $0xf4] sm:$0xf]
      %v897 = vld [vmem:[%s3 + $0xf8] sm:$0xf]
      %v898 = vld [vmem:[%s3 + $0xfc] sm:$0xf]
      %v899 = vld [vmem:[%s3 + $0x100] sm:$0xf]
      %v900 = vld [vmem:[%s3 + $0x104] sm:$0xf]
      %v901 = vld [vmem:[%s3 + $0x108] sm:$0xf]
      %v902 = vld [vmem:[%s3 + $0x10c] sm:$0xf]
      %v903 = vld [vmem:[%s3 + $0x110] sm:$0xf]
      %v904 = vld [vmem:[%s3 + $0x114] sm:$0xf]
      %v905 = vld [vmem:[%s3 + $0x118] sm:$0xf]
      %v906 = vld [vmem:[%s3 + $0x11c] sm:$0xf]
      %v907 = vld [vmem:[%s3 + $0x120] sm:$0xf]
      %v908 = vld [vmem:[%s3 + $0x124] sm:$0xf]
      %v909 = vld [vmem:[%s3 + $0x128] sm:$0xf]
      %v910 = vld [vmem:[%s3 + $0x12c] sm:$0xf]
      %v911 = vld [vmem:[%s3 + $0x130] sm:$0xf]
      %v912 = vld [vmem:[%s3 + $0x134] sm:$0xf]
      %v913 = vld [vmem:[%s3 + $0x138] sm:$0xf]
      %v914 = vld [vmem:[%s3 + $0x13c] sm:$0xf]
      %v915 = vld [vmem:[%s3 + $0x140] sm:$0xf]
      %v916 = vld [vmem:[%s3 + $0x144] sm:$0xf]
      %v917 = vld [vmem:[%s3 + $0x148] sm:$0xf]
      %v918 = vld [vmem:[%s3 + $0x14c] sm:$0xf]
      %v919 = vld [vmem:[%s3 + $0x150] sm:$0xf]
      %v920 = vld [vmem:[%s3 + $0x154] sm:$0xf]
      %v921 = vld [vmem:[%s3 + $0x158] sm:$0xf]
      %v922 = vld [vmem:[%s3 + $0x15c] sm:$0xf]
      %v923 = vld [vmem:[%s3 + $0x160] sm:$0xf]
      %v924 = vld [vmem:[%s3 + $0x164] sm:$0xf]
      %v925 = vld [vmem:[%s3 + $0x168] sm:$0xf]
      %v926 = vld [vmem:[%s3 + $0x16c] sm:$0xf]
      %v927 = vld [vmem:[%s3 + $0x170] sm:$0xf]
      %v928 = vld [vmem:[%s3 + $0x174] sm:$0xf]
      %v929 = vld [vmem:[%s3 + $0x178] sm:$0xf]
      %v930 = vld [vmem:[%s3 + $0x17c] sm:$0xf]
      %v931 = vld [vmem:[%s3 + $0x180] sm:$0xf]
      %v932 = vld [vmem:[%s3 + $0x184] sm:$0xf]
      %v933 = vld [vmem:[%s3 + $0x188] sm:$0xf]
      %v934 = vld [vmem:[%s3 + $0x18c] sm:$0xf]
      %v935 = vld [vmem:[%s3 + $0x190] sm:$0xf]
      %v936 = vld [vmem:[%s3 + $0x194] sm:$0xf]
      %v937 = vld [vmem:[%s3 + $0x198] sm:$0xf]
      %v938 = vld [vmem:[%s3 + $0x19c] sm:$0xf]
      %v939 = vld [vmem:[%s3 + $0x1a0] sm:$0xf]
      %v940 = vld [vmem:[%s3 + $0x1a4] sm:$0xf]
      %v941 = vld [vmem:[%s3 + $0x1a8] sm:$0xf]
      %v942 = vld [vmem:[%s3 + $0x1ac] sm:$0xf]
      %v943 = vld [vmem:[%s3 + $0x1b0] sm:$0xf]
      %v944 = vld [vmem:[%s3 + $0x1b4] sm:$0xf]
      %v945 = vld [vmem:[%s3 + $0x1b8] sm:$0xf]
      %v946 = vld [vmem:[%s3 + $0x1bc] sm:$0xf]
      %v947 = vld [vmem:[%s4] sm:$0x1]
      %v949 = vlaneseq
      %v950 = vshrl.u32 %v949, 7
      %v951 = vsub.s32 0, %v950
      %v952 = vrot.slane %v947, %v951
      %v1066 = vunpack.c.l.b16 %v835
      %v1067 = vunpack.c.l.b16 %v836
      %v1068 = vunpack.c.l.b16 %v837
      %v1069 = vunpack.c.l.b16 %v838
      %v1070 = vunpack.c.l.b16 %v839
      %v1071 = vunpack.c.l.b16 %v840
      %v1072 = vunpack.c.l.b16 %v841
      %v1073 = vunpack.c.l.b16 %v842
      %v1074 = vunpack.c.l.b16 %v843
      %v1075 = vunpack.c.l.b16 %v844
      %v1076 = vunpack.c.l.b16 %v845
      %v1077 = vunpack.c.l.b16 %v846
      %v1078 = vunpack.c.l.b16 %v847
      %v1079 = vunpack.c.l.b16 %v848
      %v1080 = vunpack.c.l.b16 %v849
      %v1081 = vunpack.c.l.b16 %v850
      %v1082 = vunpack.c.l.b16 %v851
      %v1083 = vunpack.c.l.b16 %v852
      %v1084 = vunpack.c.l.b16 %v853
      %v1085 = vunpack.c.l.b16 %v854
      %v1086 = vunpack.c.l.b16 %v855
      %v1087 = vunpack.c.l.b16 %v856
      %v1088 = vunpack.c.l.b16 %v857
      %v1089 = vunpack.c.l.b16 %v858
      %v1090 = vunpack.c.l.b16 %v859
      %v1091 = vunpack.c.l.b16 %v860
      %v1092 = vunpack.c.l.b16 %v861
      %v1093 = vunpack.c.l.b16 %v862
      %v1094 = vunpack.c.l.b16 %v863
      %v1095 = vunpack.c.l.b16 %v864
      %v1096 = vunpack.c.l.b16 %v865
      %v1097 = vunpack.c.l.b16 %v866
      %v1098 = vunpack.c.l.b16 %v867
      %v1099 = vunpack.c.l.b16 %v868
      %v1100 = vunpack.c.l.b16 %v869
      %v1101 = vunpack.c.l.b16 %v870
      %v1102 = vunpack.c.l.b16 %v871
      %v1103 = vunpack.c.l.b16 %v872
      %v1104 = vunpack.c.l.b16 %v873
      %v1105 = vunpack.c.l.b16 %v874
      %v1106 = vunpack.c.l.b16 %v875
      %v1107 = vunpack.c.l.b16 %v876
      %v1108 = vunpack.c.l.b16 %v877
      %v1109 = vunpack.c.l.b16 %v878
      %v1110 = vunpack.c.l.b16 %v879
      %v1111 = vunpack.c.l.b16 %v880
      %v1112 = vunpack.c.l.b16 %v881
      %v1113 = vunpack.c.l.b16 %v882
      %v1114 = vunpack.c.l.b16 %v883
      %v1115 = vunpack.c.l.b16 %v884
      %v1116 = vunpack.c.l.b16 %v885
      %v1117 = vunpack.c.l.b16 %v886
      %v1118 = vunpack.c.l.b16 %v887
      %v1119 = vunpack.c.l.b16 %v888
      %v1120 = vunpack.c.l.b16 %v889
      %v1121 = vunpack.c.l.b16 %v890
      %v1122 = vunpack.c.l.b16 %v891
      %v1123 = vunpack.c.l.b16 %v892
      %v1124 = vunpack.c.l.b16 %v893
      %v1125 = vunpack.c.l.b16 %v894
      %v1126 = vunpack.c.l.b16 %v895
      %v1127 = vunpack.c.l.b16 %v896
      %v1128 = vunpack.c.l.b16 %v897
      %v1129 = vunpack.c.l.b16 %v898
      %v1130 = vunpack.c.l.b16 %v899
      %v1131 = vunpack.c.l.b16 %v900
      %v1132 = vunpack.c.l.b16 %v901
      %v1133 = vunpack.c.l.b16 %v902
      %v1134 = vunpack.c.l.b16 %v903
      %v1135 = vunpack.c.l.b16 %v904
      %v1136 = vunpack.c.l.b16 %v905
      %v1137 = vunpack.c.l.b16 %v906
      %v1138 = vunpack.c.l.b16 %v907
      %v1139 = vunpack.c.l.b16 %v908
      %v1140 = vunpack.c.l.b16 %v909
      %v1141 = vunpack.c.l.b16 %v910
      %v1142 = vunpack.c.l.b16 %v911
      %v1143 = vunpack.c.l.b16 %v912
      %v1144 = vunpack.c.l.b16 %v913
      %v1145 = vunpack.c.l.b16 %v914
      %v1146 = vunpack.c.l.b16 %v915
      %v1147 = vunpack.c.l.b16 %v916
      %v1148 = vunpack.c.l.b16 %v917
      %v1149 = vunpack.c.l.b16 %v918
      %v1150 = vunpack.c.l.b16 %v919
      %v1151 = vunpack.c.l.b16 %v920
      %v1152 = vunpack.c.l.b16 %v921
      %v1153 = vunpack.c.l.b16 %v922
      %v1154 = vunpack.c.l.b16 %v923
      %v1155 = vunpack.c.l.b16 %v924
      %v1156 = vunpack.c.l.b16 %v925
      %v1157 = vunpack.c.l.b16 %v926
      %v1158 = vunpack.c.l.b16 %v927
      %v1159 = vunpack.c.l.b16 %v928
      %v1160 = vunpack.c.l.b16 %v929
      %v1161 = vunpack.c.l.b16 %v930
      %v1162 = vunpack.c.l.b16 %v931
      %v1163 = vunpack.c.l.b16 %v932
      %v1164 = vunpack.c.l.b16 %v933
      %v1165 = vunpack.c.l.b16 %v934
      %v1166 = vunpack.c.l.b16 %v935
      %v1167 = vunpack.c.l.b16 %v936
      %v1168 = vunpack.c.l.b16 %v937
      %v1169 = vunpack.c.l.b16 %v938
      %v1170 = vunpack.c.l.b16 %v939
      %v1171 = vunpack.c.l.b16 %v940
      %v1172 = vunpack.c.l.b16 %v941
      %v1173 = vunpack.c.l.b16 %v942
      %v1174 = vunpack.c.l.b16 %v943
      %v1175 = vunpack.c.l.b16 %v944
      %v1176 = vunpack.c.l.b16 %v945
      %v1177 = vunpack.c.l.b16 %v946
      %v1178 = vpack.c.b16 %v1067, %v1066
      %v1179 = vpack.c.b16 %v1069, %v1068
      %v1180 = vpack.c.b16 %v1071, %v1070
      %v1181 = vpack.c.b16 %v1073, %v1072
      %v1182 = vpack.c.b16 %v1075, %v1074
      %v1183 = vpack.c.b16 %v1077, %v1076
      %v1184 = vpack.c.b16 %v1079, %v1078
      %v1185 = vpack.c.b16 %v1081, %v1080
      %v1186 = vpack.c.b16 %v1083, %v1082
      %v1187 = vpack.c.b16 %v1085, %v1084
      %v1188 = vpack.c.b16 %v1087, %v1086
      %v1189 = vpack.c.b16 %v1089, %v1088
      %v1190 = vpack.c.b16 %v1091, %v1090
      %v1191 = vpack.c.b16 %v1093, %v1092
      %v1192 = vpack.c.b16 %v1095, %v1094
      %v1193 = vpack.c.b16 %v1097, %v1096
      %v1194 = vpack.c.b16 %v1099, %v1098
      %v1195 = vpack.c.b16 %v1101, %v1100
      %v1196 = vpack.c.b16 %v1103, %v1102
      %v1197 = vpack.c.b16 %v1105, %v1104
      %v1198 = vpack.c.b16 %v1107, %v1106
      %v1199 = vpack.c.b16 %v1109, %v1108
      %v1200 = vpack.c.b16 %v1111, %v1110
      %v1201 = vpack.c.b16 %v1113, %v1112
      %v1202 = vpack.c.b16 %v1115, %v1114
      %v1203 = vpack.c.b16 %v1117, %v1116
      %v1204 = vpack.c.b16 %v1119, %v1118
      %v1205 = vpack.c.b16 %v1121, %v1120
      %v1206 = vpack.c.b16 %v1123, %v1122
      %v1207 = vpack.c.b16 %v1125, %v1124
      %v1208 = vpack.c.b16 %v1127, %v1126
      %v1209 = vpack.c.b16 %v1129, %v1128
      %v1210 = vpack.c.b16 %v1131, %v1130
      %v1211 = vpack.c.b16 %v1133, %v1132
      %v1212 = vpack.c.b16 %v1135, %v1134
      %v1213 = vpack.c.b16 %v1137, %v1136
      %v1214 = vpack.c.b16 %v1139, %v1138
      %v1215 = vpack.c.b16 %v1141, %v1140
      %v1216 = vpack.c.b16 %v1143, %v1142
      %v1217 = vpack.c.b16 %v1145, %v1144
      %v1218 = vpack.c.b16 %v1147, %v1146
      %v1219 = vpack.c.b16 %v1149, %v1148
      %v1220 = vpack.c.b16 %v1151, %v1150
      %v1221 = vpack.c.b16 %v1153, %v1152
      %v1222 = vpack.c.b16 %v1155, %v1154
      %v1223 = vpack.c.b16 %v1157, %v1156
      %v1224 = vpack.c.b16 %v1159, %v1158
      %v1225 = vpack.c.b16 %v1161, %v1160
      %v1226 = vpack.c.b16 %v1163, %v1162
      %v1227 = vpack.c.b16 %v1165, %v1164
      %v1228 = vpack.c.b16 %v1167, %v1166
      %v1229 = vpack.c.b16 %v1169, %v1168
      %v1230 = vpack.c.b16 %v1171, %v1170
      %v1231 = vpack.c.b16 %v1173, %v1172
      %v1232 = vpack.c.b16 %v1175, %v1174
      %v1233 = vpack.c.b16 %v1177, %v1176
      %1290 = vmatprep.subr.bf16.mxu0 0
      %1291 = vmatpush1.bf16.msra.mxu0 %v1178
      %1292 = vmatprep.subr.bf16.mxu0 0
      %1293 = vmatpush1.bf16.msra.mxu0 %v1179
      %1294 = vmatprep.subr.bf16.mxu0 0
      %1295 = vmatpush1.bf16.msra.mxu0 %v1180
      %1296 = vmatprep.subr.bf16.mxu0 0
      %1297 = vmatpush1.bf16.msra.mxu0 %v1181
      %1298 = vmatprep.subr.bf16.mxu0 0
      %1299 = vmatpush1.bf16.msra.mxu0 %v1182
      %1300 = vmatprep.subr.bf16.mxu0 0
      %1301 = vmatpush1.bf16.msra.mxu0 %v1183
      %1302 = vmatprep.subr.bf16.mxu0 0
      %1303 = vmatpush1.bf16.msra.mxu0 %v1184
      %1304 = vmatprep.subr.bf16.mxu0 0
      %1305 = vmatpush1.bf16.msra.mxu0 %v1185
      %1306 = vmatprep.subr.bf16.mxu0 0
      %1307 = vmatpush1.bf16.msra.mxu0 %v1186
      %1308 = vmatprep.subr.bf16.mxu0 0
      %1309 = vmatpush1.bf16.msra.mxu0 %v1187
      %1310 = vmatprep.subr.bf16.mxu0 0
      %1311 = vmatpush1.bf16.msra.mxu0 %v1188
      %1312 = vmatprep.subr.bf16.mxu0 0
      %1313 = vmatpush1.bf16.msra.mxu0 %v1189
      %1314 = vmatprep.subr.bf16.mxu0 0
      %1315 = vmatpush1.bf16.msra.mxu0 %v1190
      %1316 = vmatprep.subr.bf16.mxu0 0
      %1317 = vmatpush1.bf16.msra.mxu0 %v1191
      %1318 = vmatprep.subr.bf16.mxu0 0
      %1319 = vmatpush1.bf16.msra.mxu0 %v1192
      %1320 = vmatprep.subr.bf16.mxu0 0
      %1321 = vmatpush1.bf16.msra.mxu0 %v1193
      %1322 = vmatprep.mubr.bf16.mxu0 %v829
      %1323 = vmatmul.mubr.bf16.gmra.mrb[0].mxu0 %v828
      %v1324 = vpop.f32.mrb[0].mxu0
      %v1325 = vadd.f32 %v952, %v1324
      %v1326 = vpop.f32.mrb[0].mxu0
      %v1327 = vpop.f32.mrb[0].mxu0
      %v1328 = vadd.f32 %v952, %v1327
      %v1329 = vpop.f32.mrb[0].mxu0
      %1330 = vdwg.mxu0
      %1331 = vmatprep.subr.bf16.mxu0 0
      %1332 = vmatpush1.bf16.msra.mxu0 %v1194
      %1333 = vmatprep.subr.bf16.mxu0 0
      %1334 = vmatpush1.bf16.msra.mxu0 %v1195
      %1335 = vmatprep.subr.bf16.mxu0 0
      %1336 = vmatpush1.bf16.msra.mxu0 %v1196
      %1337 = vmatprep.subr.bf16.mxu0 0
      %1338 = vmatpush1.bf16.msra.mxu0 %v1197
      %1339 = vmatprep.subr.bf16.mxu0 0
      %1340 = vmatpush1.bf16.msra.mxu0 %v1198
      %1341 = vmatprep.subr.bf16.mxu0 0
      %1342 = vmatpush1.bf16.msra.mxu0 %v1199
      %1343 = vmatprep.subr.bf16.mxu0 0
      %1344 = vmatpush1.bf16.msra.mxu0 %v1200
      %1345 = vmatprep.subr.bf16.mxu0 0
      %1346 = vmatpush1.bf16.msra.mxu0 %v1201
      %1347 = vmatprep.subr.bf16.mxu0 0
      %1348 = vmatpush1.bf16.msra.mxu0 %v1202
      %1349 = vmatprep.subr.bf16.mxu0 0
      %1350 = vmatpush1.bf16.msra.mxu0 %v1203
      %1351 = vmatprep.subr.bf16.mxu0 0
      %1352 = vmatpush1.bf16.msra.mxu0 %v1204
      %1353 = vmatprep.subr.bf16.mxu0 0
      %1354 = vmatpush1.bf16.msra.mxu0 %v1205
      %1355 = vmatprep.subr.bf16.mxu0 0
      %1356 = vmatpush1.bf16.msra.mxu0 %v1206
      %1357 = vmatprep.subr.bf16.mxu0 0
      %1358 = vmatpush1.bf16.msra.mxu0 %v1207
      %1359 = vmatprep.subr.bf16.mxu0 0
      %1360 = vmatpush1.bf16.msra.mxu0 %v1208
      %1361 = vmatprep.subr.bf16.mxu0 0
      %1362 = vmatpush1.bf16.msra.mxu0 %v1209
      %1363 = vmatprep.mubr.bf16.mxu0 %v831
      %1364 = vmatmul.mubr.bf16.gmra.mrb[0].mxu0 %v830
      %v1365 = vpop.f32.mrb[0].mxu0
      %v1366 = vadd.f32 %v1325, %v1365
      %v1367 = vpop.f32.mrb[0].mxu0
      %v1368 = vpop.f32.mrb[0].mxu0
      %v1369 = vadd.f32 %v1328, %v1368
      %v1370 = vpop.f32.mrb[0].mxu0
      %1371 = vdwg.mxu0
      %1372 = vmatprep.subr.bf16.mxu0 0
      %1373 = vmatpush1.bf16.msra.mxu0 %v1210
      %1374 = vmatprep.subr.bf16.mxu0 0
      %1375 = vmatpush1.bf16.msra.mxu0 %v1211
      %1376 = vmatprep.subr.bf16.mxu0 0
      %1377 = vmatpush1.bf16.msra.mxu0 %v1212
      %1378 = vmatprep.subr.bf16.mxu0 0
      %1379 = vmatpush1.bf16.msra.mxu0 %v1213
      %1380 = vmatprep.subr.bf16.mxu0 0
      %1381 = vmatpush1.bf16.msra.mxu0 %v1214
      %1382 = vmatprep.subr.bf16.mxu0 0
      %1383 = vmatpush1.bf16.msra.mxu0 %v1215
      %1384 = vmatprep.subr.bf16.mxu0 0
      %1385 = vmatpush1.bf16.msra.mxu0 %v1216
      %1386 = vmatprep.subr.bf16.mxu0 0
      %1387 = vmatpush1.bf16.msra.mxu0 %v1217
      %1388 = vmatprep.subr.bf16.mxu0 0
      %1389 = vmatpush1.bf16.msra.mxu0 %v1218
      %1390 = vmatprep.subr.bf16.mxu0 0
      %1391 = vmatpush1.bf16.msra.mxu0 %v1219
      %1392 = vmatprep.subr.bf16.mxu0 0
      %1393 = vmatpush1.bf16.msra.mxu0 %v1220
      %1394 = vmatprep.subr.bf16.mxu0 0
      %1395 = vmatpush1.bf16.msra.mxu0 %v1221
      %1396 = vmatprep.subr.bf16.mxu0 0
      %1397 = vmatpush1.bf16.msra.mxu0 %v1222
      %1398 = vmatprep.subr.bf16.mxu0 0
      %1399 = vmatpush1.bf16.msra.mxu0 %v1223
      %1400 = vmatprep.subr.bf16.mxu0 0
      %1401 = vmatpush1.bf16.msra.mxu0 %v1224
      %1402 = vmatprep.subr.bf16.mxu0 0
      %1403 = vmatpush1.bf16.msra.mxu0 %v1225
      %1404 = vmatprep.mubr.bf16.mxu0 %v833
      %1405 = vmatmul.mubr.bf16.gmra.mrb[0].mxu0 %v832
      %v1406 = vpop.f32.mrb[0].mxu0
      %v1407 = vadd.f32 %v1366, %v1406
      %v1408 = vpop.f32.mrb[0].mxu0
      %v1409 = vpop.f32.mrb[0].mxu0
      %v1410 = vadd.f32 %v1369, %v1409
      %v1411 = vpop.f32.mrb[0].mxu0
      %1412 = vdwg.mxu0
      %1413 = vmatprep.subr.bf16.mxu0 0
      %1414 = vmatpush1.bf16.msra.mxu0 %v1226
      %1415 = vmatprep.subr.bf16.mxu0 0
      %1416 = vmatpush1.bf16.msra.mxu0 %v1227
      %1417 = vmatprep.subr.bf16.mxu0 0
      %1418 = vmatpush1.bf16.msra.mxu0 %v1228
      %1419 = vmatprep.subr.bf16.mxu0 0
      %1420 = vmatpush1.bf16.msra.mxu0 %v1229
      %1421 = vmatprep.subr.bf16.mxu0 0
      %1422 = vmatpush1.bf16.msra.mxu0 %v1230
      %1423 = vmatprep.subr.bf16.mxu0 0
      %1424 = vmatpush1.bf16.msra.mxu0 %v1231
      %1425 = vmatprep.subr.bf16.mxu0 0
      %1426 = vmatpush1.bf16.msra.mxu0 %v1232
      %1427 = vmatprep.subr.bf16.mxu0 0
      %1428 = vmatpush1.bf16.msra.mxu0 %v1233
      %1429 = vmatprep.subr.bf16.mxu0 0
      %1430 = vmatpush1.bf16.msra.mxu0 0
      %1431 = vmatprep.subr.bf16.mxu0 0
      %1432 = vmatpush1.bf16.msra.mxu0 0
      %1433 = vmatprep.subr.bf16.mxu0 0
      %1434 = vmatpush1.bf16.msra.mxu0 0
      %1435 = vmatprep.subr.bf16.mxu0 0
      %1436 = vmatpush1.bf16.msra.mxu0 0
      %1437 = vmatprep.subr.bf16.mxu0 0
      %1438 = vmatpush1.bf16.msra.mxu0 0
      %1439 = vmatprep.subr.bf16.mxu0 0
      %1440 = vmatpush1.bf16.msra.mxu0 0
      %1441 = vmatprep.subr.bf16.mxu0 0
      %1442 = vmatpush1.bf16.msra.mxu0 0
      %1443 = vmatprep.subr.bf16.mxu0 0
      %1444 = vmatpush1.bf16.msra.mxu0 0
      %1445 = vmatprep.mubr.bf16.mxu0 0
      %1446 = vmatmul.mubr.bf16.gmra.mrb[0].mxu0 %v834
      %v1447 = vpop.f32.mrb[0].mxu0
      %v1448 = vadd.f32 %v1407, %v1447
      %v1449 = vpop.f32.mrb[0].mxu0
      %v1450 = vpop.f32.mrb[0].mxu0
      %v1451 = vadd.f32 %v1410, %v1450
      %v1452 = vpop.f32.mrb[0].mxu0
      %1453 = vdwg.mxu0
      %v1454 = vld [vmem:[#allocation3] sm:$0xff]
      %v1455 = vld [vmem:[#allocation3 + $0x8] sm:$0xff]
      %1458 = vrot.lane.b32.xlu0 %v1454, 60
      %v1459 = vpop.permute.xlu0 %1458
      %1460 = vrot.lane.b32.xlu0 %v1455, 60
      %v1461 = vpop.permute.xlu0 %1460
      %1464 = vrot.lane.b32.xlu0 %v1454, 120
      %v1465 = vpop.permute.xlu0 %1464
      %1466 = vrot.lane.b32.xlu0 %v1455, 120
      %v1467 = vpop.permute.xlu0 %1466
      %1470 = vrot.lane.b32.xlu0 %v1454, 52
      %v1471 = vpop.permute.xlu0 %1470
      %1472 = vrot.lane.b32.xlu0 %v1455, 52
      %v1473 = vpop.permute.xlu0 %1472
      %1476 = vrot.lane.b32.xlu0 %v1454, 112
      %v1477 = vpop.permute.xlu0 %1476
      %1478 = vrot.lane.b32.xlu0 %v1455, 112
      %v1479 = vpop.permute.xlu0 %1478
      %1482 = vrot.lane.b32.xlu0 %v1454, 44
      %v1483 = vpop.permute.xlu0 %1482
      %1484 = vrot.lane.b32.xlu0 %v1455, 44
      %v1485 = vpop.permute.xlu0 %1484
      %1488 = vrot.lane.b32.xlu0 %v1454, 104
      %v1489 = vpop.permute.xlu0 %1488
      %1490 = vrot.lane.b32.xlu0 %v1455, 104
      %v1491 = vpop.permute.xlu0 %1490
      %v1494 = vsel %vm334, %v1454, %v1459
      %v1495 = vsel %vm334, %v1455, %v1461
      %v1496 = vsel %vm334, %v1465, %v1471
      %v1497 = vsel %vm334, %v1467, %v1473
      %v1498 = vsel %vm334, %v1477, %v1483
      %v1499 = vsel %vm334, %v1479, %v1485
      %v1500 = vpack.c.bf16 %v1495, %v1494
      %v1501 = vpack.c.bf16 %v1497, %v1496
      %v1502 = vpack.c.bf16 %v1499, %v1498
      %v1503 = vpack.c.bf16 %v1491, %v1489
      %v1504 = vld [vmem:[%s5] sm:$0xf]
      %v1505 = vld [vmem:[%s5 + $0x4] sm:$0xf]
      %v1506 = vld [vmem:[%s5 + $0x8] sm:$0xf]
      %v1507 = vld [vmem:[%s5 + $0xc] sm:$0xf]
      %v1508 = vld [vmem:[%s5 + $0x10] sm:$0xf]
      %v1509 = vld [vmem:[%s5 + $0x14] sm:$0xf]
      %v1510 = vld [vmem:[%s5 + $0x18] sm:$0xf]
      %v1511 = vld [vmem:[%s5 + $0x1c] sm:$0xf]
      %v1512 = vld [vmem:[%s5 + $0x20] sm:$0xf]
      %v1513 = vld [vmem:[%s5 + $0x24] sm:$0xf]
      %v1514 = vld [vmem:[%s5 + $0x28] sm:$0xf]
      %v1515 = vld [vmem:[%s5 + $0x2c] sm:$0xf]
      %v1516 = vld [vmem:[%s5 + $0x30] sm:$0xf]
      %v1517 = vld [vmem:[%s5 + $0x34] sm:$0xf]
      %v1518 = vld [vmem:[%s5 + $0x38] sm:$0xf]
      %v1519 = vld [vmem:[%s5 + $0x3c] sm:$0xf]
      %v1520 = vld [vmem:[%s5 + $0x40] sm:$0xf]
      %v1521 = vld [vmem:[%s5 + $0x44] sm:$0xf]
      %v1522 = vld [vmem:[%s5 + $0x48] sm:$0xf]
      %v1523 = vld [vmem:[%s5 + $0x4c] sm:$0xf]
      %v1524 = vld [vmem:[%s5 + $0x50] sm:$0xf]
      %v1525 = vld [vmem:[%s5 + $0x54] sm:$0xf]
      %v1526 = vld [vmem:[%s5 + $0x58] sm:$0xf]
      %v1527 = vld [vmem:[%s5 + $0x5c] sm:$0xf]
      %v1528 = vld [vmem:[%s5 + $0x60] sm:$0xf]
      %v1529 = vld [vmem:[%s5 + $0x64] sm:$0xf]
      %v1530 = vld [vmem:[%s5 + $0x68] sm:$0xf]
      %v1531 = vld [vmem:[%s5 + $0x6c] sm:$0xf]
      %v1532 = vld [vmem:[%s5 + $0x70] sm:$0xf]
      %v1533 = vld [vmem:[%s5 + $0x74] sm:$0xf]
      %v1534 = vld [vmem:[%s5 + $0x78] sm:$0xf]
      %v1535 = vld [vmem:[%s5 + $0x7c] sm:$0xf]
      %v1536 = vld [vmem:[%s5 + $0x80] sm:$0xf]
      %v1537 = vld [vmem:[%s5 + $0x84] sm:$0xf]
      %v1538 = vld [vmem:[%s5 + $0x88] sm:$0xf]
      %v1539 = vld [vmem:[%s5 + $0x8c] sm:$0xf]
      %v1540 = vld [vmem:[%s5 + $0x90] sm:$0xf]
      %v1541 = vld [vmem:[%s5 + $0x94] sm:$0xf]
      %v1542 = vld [vmem:[%s5 + $0x98] sm:$0xf]
      %v1543 = vld [vmem:[%s5 + $0x9c] sm:$0xf]
      %v1544 = vld [vmem:[%s5 + $0xa0] sm:$0xf]
      %v1545 = vld [vmem:[%s5 + $0xa4] sm:$0xf]
      %v1546 = vld [vmem:[%s5 + $0xa8] sm:$0xf]
      %v1547 = vld [vmem:[%s5 + $0xac] sm:$0xf]
      %v1548 = vld [vmem:[%s5 + $0xb0] sm:$0xf]
      %v1549 = vld [vmem:[%s5 + $0xb4] sm:$0xf]
      %v1550 = vld [vmem:[%s5 + $0xb8] sm:$0xf]
      %v1551 = vld [vmem:[%s5 + $0xbc] sm:$0xf]
      %v1552 = vld [vmem:[%s5 + $0xc0] sm:$0xf]
      %v1553 = vld [vmem:[%s5 + $0xc4] sm:$0xf]
      %v1554 = vld [vmem:[%s5 + $0xc8] sm:$0xf]
      %v1555 = vld [vmem:[%s5 + $0xcc] sm:$0xf]
      %v1556 = vld [vmem:[%s5 + $0xd0] sm:$0xf]
      %v1557 = vld [vmem:[%s5 + $0xd4] sm:$0xf]
      %v1558 = vld [vmem:[%s5 + $0xd8] sm:$0xf]
      %v1559 = vld [vmem:[%s5 + $0xdc] sm:$0xf]
      %v1560 = vld [vmem:[%s6] sm:$0x1]
      %v1562 = vlaneseq
      %v1563 = vshrl.u32 %v1562, 7
      %v1564 = vsub.s32 0, %v1563
      %v1565 = vrot.slane %v1560, %v1564
      %v1623 = vunpack.c.l.b16 %v1504
      %v1624 = vunpack.c.l.b16 %v1505
      %v1625 = vunpack.c.l.b16 %v1506
      %v1626 = vunpack.c.l.b16 %v1507
      %v1627 = vunpack.c.l.b16 %v1508
      %v1628 = vunpack.c.l.b16 %v1509
      %v1629 = vunpack.c.l.b16 %v1510
      %v1630 = vunpack.c.l.b16 %v1511
      %v1631 = vunpack.c.l.b16 %v1512
      %v1632 = vunpack.c.l.b16 %v1513
      %v1633 = vunpack.c.l.b16 %v1514
      %v1634 = vunpack.c.l.b16 %v1515
      %v1635 = vunpack.c.l.b16 %v1516
      %v1636 = vunpack.c.l.b16 %v1517
      %v1637 = vunpack.c.l.b16 %v1518
      %v1638 = vunpack.c.l.b16 %v1519
      %v1639 = vunpack.c.l.b16 %v1520
      %v1640 = vunpack.c.l.b16 %v1521
      %v1641 = vunpack.c.l.b16 %v1522
      %v1642 = vunpack.c.l.b16 %v1523
      %v1643 = vunpack.c.l.b16 %v1524
      %v1644 = vunpack.c.l.b16 %v1525
      %v1645 = vunpack.c.l.b16 %v1526
      %v1646 = vunpack.c.l.b16 %v1527
      %v1647 = vunpack.c.l.b16 %v1528
      %v1648 = vunpack.c.l.b16 %v1529
      %v1649 = vunpack.c.l.b16 %v1530
      %v1650 = vunpack.c.l.b16 %v1531
      %v1651 = vunpack.c.l.b16 %v1532
      %v1652 = vunpack.c.l.b16 %v1533
      %v1653 = vunpack.c.l.b16 %v1534
      %v1654 = vunpack.c.l.b16 %v1535
      %v1655 = vunpack.c.l.b16 %v1536
      %v1656 = vunpack.c.l.b16 %v1537
      %v1657 = vunpack.c.l.b16 %v1538
      %v1658 = vunpack.c.l.b16 %v1539
      %v1659 = vunpack.c.l.b16 %v1540
      %v1660 = vunpack.c.l.b16 %v1541
      %v1661 = vunpack.c.l.b16 %v1542
      %v1662 = vunpack.c.l.b16 %v1543
      %v1663 = vunpack.c.l.b16 %v1544
      %v1664 = vunpack.c.l.b16 %v1545
      %v1665 = vunpack.c.l.b16 %v1546
      %v1666 = vunpack.c.l.b16 %v1547
      %v1667 = vunpack.c.l.b16 %v1548
      %v1668 = vunpack.c.l.b16 %v1549
      %v1669 = vunpack.c.l.b16 %v1550
      %v1670 = vunpack.c.l.b16 %v1551
      %v1671 = vunpack.c.l.b16 %v1552
      %v1672 = vunpack.c.l.b16 %v1553
      %v1673 = vunpack.c.l.b16 %v1554
      %v1674 = vunpack.c.l.b16 %v1555
      %v1675 = vunpack.c.l.b16 %v1556
      %v1676 = vunpack.c.l.b16 %v1557
      %v1677 = vunpack.c.l.b16 %v1558
      %v1678 = vunpack.c.l.b16 %v1559
      %v1679 = vpack.c.b16 %v1624, %v1623
      %v1680 = vpack.c.b16 %v1626, %v1625
      %v1681 = vpack.c.b16 %v1628, %v1627
      %v1682 = vpack.c.b16 %v1630, %v1629
      %v1683 = vpack.c.b16 %v1632, %v1631
      %v1684 = vpack.c.b16 %v1634, %v1633
      %v1685 = vpack.c.b16 %v1636, %v1635
      %v1686 = vpack.c.b16 %v1638, %v1637
      %v1687 = vpack.c.b16 %v1640, %v1639
      %v1688 = vpack.c.b16 %v1642, %v1641
      %v1689 = vpack.c.b16 %v1644, %v1643
      %v1690 = vpack.c.b16 %v1646, %v1645
      %v1691 = vpack.c.b16 %v1648, %v1647
      %v1692 = vpack.c.b16 %v1650, %v1649
      %v1693 = vpack.c.b16 %v1652, %v1651
      %v1694 = vpack.c.b16 %v1654, %v1653
      %v1695 = vpack.c.b16 %v1656, %v1655
      %v1696 = vpack.c.b16 %v1658, %v1657
      %v1697 = vpack.c.b16 %v1660, %v1659
      %v1698 = vpack.c.b16 %v1662, %v1661
      %v1699 = vpack.c.b16 %v1664, %v1663
      %v1700 = vpack.c.b16 %v1666, %v1665
      %v1701 = vpack.c.b16 %v1668, %v1667
      %v1702 = vpack.c.b16 %v1670, %v1669
      %v1703 = vpack.c.b16 %v1672, %v1671
      %v1704 = vpack.c.b16 %v1674, %v1673
      %v1705 = vpack.c.b16 %v1676, %v1675
      %v1706 = vpack.c.b16 %v1678, %v1677
      %v1736 = vsel %vm334, %v1503, 0
      %1738 = vmatprep.subr.bf16.mxu0 0
      %1739 = vmatpush1.bf16.msra.mxu0 %v1679
      %1740 = vmatprep.subr.bf16.mxu0 0
      %1741 = vmatpush1.bf16.msra.mxu0 %v1680
      %1742 = vmatprep.subr.bf16.mxu0 0
      %1743 = vmatpush1.bf16.msra.mxu0 %v1681
      %1744 = vmatprep.subr.bf16.mxu0 0
      %1745 = vmatpush1.bf16.msra.mxu0 %v1682
      %1746 = vmatprep.subr.bf16.mxu0 0
      %1747 = vmatpush1.bf16.msra.mxu0 %v1683
      %1748 = vmatprep.subr.bf16.mxu0 0
      %1749 = vmatpush1.bf16.msra.mxu0 %v1684
      %1750 = vmatprep.subr.bf16.mxu0 0
      %1751 = vmatpush1.bf16.msra.mxu0 %v1685
      %1752 = vmatprep.subr.bf16.mxu0 0
      %1753 = vmatpush1.bf16.msra.mxu0 %v1686
      %1754 = vmatprep.subr.bf16.mxu0 0
      %1755 = vmatpush1.bf16.msra.mxu0 %v1687
      %1756 = vmatprep.subr.bf16.mxu0 0
      %1757 = vmatpush1.bf16.msra.mxu0 %v1688
      %1758 = vmatprep.subr.bf16.mxu0 0
      %1759 = vmatpush1.bf16.msra.mxu0 %v1689
      %1760 = vmatprep.subr.bf16.mxu0 0
      %1761 = vmatpush1.bf16.msra.mxu0 %v1690
      %1762 = vmatprep.subr.bf16.mxu0 0
      %1763 = vmatpush1.bf16.msra.mxu0 %v1691
      %1764 = vmatprep.subr.bf16.mxu0 0
      %1765 = vmatpush1.bf16.msra.mxu0 %v1692
      %1766 = vmatprep.subr.bf16.mxu0 0
      %1767 = vmatpush1.bf16.msra.mxu0 %v1693
      %1768 = vmatprep.subr.bf16.mxu0 0
      %1769 = vmatpush1.bf16.msra.mxu0 %v1694
      %1770 = vmatprep.mubr.bf16.mxu0 %v1501
      %1771 = vmatmul.mubr.bf16.gmra.mrb[0].mxu0 %v1500
      %v1772 = vpop.f32.mrb[0].mxu0
      %v1773 = vadd.f32 %v1565, %v1772
      %v1774 = vpop.f32.mrb[0].mxu0
      %v1775 = vpop.f32.mrb[0].mxu0
      %v1776 = vadd.f32 %v1565, %v1775
      %v1777 = vpop.f32.mrb[0].mxu0
      %1778 = vdwg.mxu0
      %1779 = vmatprep.subr.bf16.mxu0 0
      %1780 = vmatpush1.bf16.msra.mxu0 %v1695
      %1781 = vmatprep.subr.bf16.mxu0 0
      %1782 = vmatpush1.bf16.msra.mxu0 %v1696
      %1783 = vmatprep.subr.bf16.mxu0 0
      %1784 = vmatpush1.bf16.msra.mxu0 %v1697
      %1785 = vmatprep.subr.bf16.mxu0 0
      %1786 = vmatpush1.bf16.msra.mxu0 %v1698
      %1787 = vmatprep.subr.bf16.mxu0 0
      %1788 = vmatpush1.bf16.msra.mxu0 %v1699
      %1789 = vmatprep.subr.bf16.mxu0 0
      %1790 = vmatpush1.bf16.msra.mxu0 %v1700
      %1791 = vmatprep.subr.bf16.mxu0 0
      %1792 = vmatpush1.bf16.msra.mxu0 %v1701
      %1793 = vmatprep.subr.bf16.mxu0 0
      %1794 = vmatpush1.bf16.msra.mxu0 %v1702
      %1795 = vmatprep.subr.bf16.mxu0 0
      %1796 = vmatpush1.bf16.msra.mxu0 %v1703
      %1797 = vmatprep.subr.bf16.mxu0 0
      %1798 = vmatpush1.bf16.msra.mxu0 %v1704
      %1799 = vmatprep.subr.bf16.mxu0 0
      %1800 = vmatpush1.bf16.msra.mxu0 %v1705
      %1801 = vmatprep.subr.bf16.mxu0 0
      %1802 = vmatpush1.bf16.msra.mxu0 %v1706
      %1803 = vmatprep.subr.bf16.mxu0 0
      %1804 = vmatpush1.bf16.msra.mxu0 0
      %1805 = vmatprep.subr.bf16.mxu0 0
      %1806 = vmatpush1.bf16.msra.mxu0 0
      %1807 = vmatprep.subr.bf16.mxu0 0
      %1808 = vmatpush1.bf16.msra.mxu0 0
      %1809 = vmatprep.subr.bf16.mxu0 0
      %1810 = vmatpush1.bf16.msra.mxu0 0
      %1811 = vmatprep.mubr.bf16.mxu0 %v1736
      %1812 = vmatmul.mubr.bf16.gmra.mrb[0].mxu0 %v1502
      %v1813 = vpop.f32.mrb[0].mxu0
      %v1814 = vadd.f32 %v1773, %v1813
      %v1815 = vpop.f32.mrb[0].mxu0
      %v1816 = vpop.f32.mrb[0].mxu0
      %v1817 = vadd.f32 %v1776, %v1816
      %v1818 = vpop.f32.mrb[0].mxu0
      %1819 = vdwg.mxu0
      %1820 = vst [vmem:[#allocation5 + $0x3] sm:$0xff] %v1814
      %1821 = vst [vmem:[#allocation5 + $0xb] sm:$0xff] %v1817
      %v1822 = vld [vmem:[#allocation5] sm:$0xff]
      %v1823 = vld [vmem:[#allocation5 + $0x8] sm:$0xff]
      %v1824 = vld [vmem:[#allocation5 + $0x1] sm:$0xff]
      %v1825 = vld [vmem:[#allocation5 + $0x9] sm:$0xff]
      %v1826 = vld [vmem:[#allocation5 + $0x2] sm:$0xff]
      %v1827 = vld [vmem:[#allocation5 + $0xa] sm:$0xff]
      %v1828 = vld [vmem:[#allocation5 + $0x3] sm:$0xff]
      %v1829 = vld [vmem:[#allocation5 + $0xb] sm:$0xff]
      %v1830 = vld [vmem:[#allocation5 + $0x4] sm:$0xff]
      %v1831 = vld [vmem:[#allocation5 + $0xc] sm:$0xff]
      %v1832 = vld [vmem:[#allocation5 + $0x5] sm:$0xff]
      %v1833 = vld [vmem:[#allocation5 + $0xd] sm:$0xff]
      %v1834 = vld [vmem:[#allocation5 + $0x6] sm:$0xff]
      %v1835 = vld [vmem:[#allocation5 + $0xe] sm:$0xff]
      %v1836 = vpack.c.bf16 %v1823, %v1822
      %v1837 = vpack.c.bf16 %v1825, %v1824
      %v1838 = vpack.c.bf16 %v1827, %v1826
      %v1839 = vpack.c.bf16 %v1829, %v1828
      %v1840 = vpack.c.bf16 %v1831, %v1830
      %v1841 = vpack.c.bf16 %v1833, %v1832
      %v1842 = vpack.c.bf16 %v1835, %v1834
      %v1843 = vld [vmem:[%s7] sm:$0xf]
      %v1844 = vld [vmem:[%s7 + $0x4] sm:$0xf]
      %v1845 = vld [vmem:[%s7 + $0x8] sm:$0xf]
      %v1846 = vld [vmem:[%s7 + $0xc] sm:$0xf]
      %v1847 = vld [vmem:[%s7 + $0x10] sm:$0xf]
      %v1848 = vld [vmem:[%s7 + $0x14] sm:$0xf]
      %v1849 = vld [vmem:[%s7 + $0x18] sm:$0xf]
      %v1850 = vld [vmem:[%s7 + $0x1c] sm:$0xf]
      %v1851 = vld [vmem:[%s7 + $0x20] sm:$0xf]
      %v1852 = vld [vmem:[%s7 + $0x24] sm:$0xf]
      %v1853 = vld [vmem:[%s7 + $0x28] sm:$0xf]
      %v1854 = vld [vmem:[%s7 + $0x2c] sm:$0xf]
      %v1855 = vld [vmem:[%s7 + $0x30] sm:$0xf]
      %v1856 = vld [vmem:[%s7 + $0x34] sm:$0xf]
      %v1857 = vld [vmem:[%s7 + $0x38] sm:$0xf]
      %v1858 = vld [vmem:[%s7 + $0x3c] sm:$0xf]
      %v1859 = vld [vmem:[%s7 + $0x40] sm:$0xf]
      %v1860 = vld [vmem:[%s7 + $0x44] sm:$0xf]
      %v1861 = vld [vmem:[%s7 + $0x48] sm:$0xf]
      %v1862 = vld [vmem:[%s7 + $0x4c] sm:$0xf]
      %v1863 = vld [vmem:[%s7 + $0x50] sm:$0xf]
      %v1864 = vld [vmem:[%s7 + $0x54] sm:$0xf]
      %v1865 = vld [vmem:[%s7 + $0x58] sm:$0xf]
      %v1866 = vld [vmem:[%s7 + $0x5c] sm:$0xf]
      %v1867 = vld [vmem:[%s7 + $0x60] sm:$0xf]
      %v1868 = vld [vmem:[%s7 + $0x64] sm:$0xf]
      %v1869 = vld [vmem:[%s7 + $0x68] sm:$0xf]
      %v1870 = vld [vmem:[%s7 + $0x6c] sm:$0xf]
      %v1871 = vld [vmem:[%s7 + $0x70] sm:$0xf]
      %v1872 = vld [vmem:[%s7 + $0x74] sm:$0xf]
      %v1873 = vld [vmem:[%s7 + $0x78] sm:$0xf]
      %v1874 = vld [vmem:[%s7 + $0x7c] sm:$0xf]
      %v1875 = vld [vmem:[%s7 + $0x80] sm:$0xf]
      %v1876 = vld [vmem:[%s7 + $0x84] sm:$0xf]
      %v1877 = vld [vmem:[%s7 + $0x88] sm:$0xf]
      %v1878 = vld [vmem:[%s7 + $0x8c] sm:$0xf]
      %v1879 = vld [vmem:[%s7 + $0x90] sm:$0xf]
      %v1880 = vld [vmem:[%s7 + $0x94] sm:$0xf]
      %v1881 = vld [vmem:[%s7 + $0x98] sm:$0xf]
      %v1882 = vld [vmem:[%s7 + $0x9c] sm:$0xf]
      %v1883 = vld [vmem:[%s7 + $0xa0] sm:$0xf]
      %v1884 = vld [vmem:[%s7 + $0xa4] sm:$0xf]
      %v1885 = vld [vmem:[%s7 + $0xa8] sm:$0xf]
      %v1886 = vld [vmem:[%s7 + $0xac] sm:$0xf]
      %v1887 = vld [vmem:[%s7 + $0xb0] sm:$0xf]
      %v1888 = vld [vmem:[%s7 + $0xb4] sm:$0xf]
      %v1889 = vld [vmem:[%s7 + $0xb8] sm:$0xf]
      %v1890 = vld [vmem:[%s7 + $0xbc] sm:$0xf]
      %v1891 = vld [vmem:[%s7 + $0xc0] sm:$0xf]
      %v1892 = vld [vmem:[%s7 + $0xc4] sm:$0xf]
      %v1893 = vld [vmem:[%s7 + $0xc8] sm:$0xf]
      %v1894 = vld [vmem:[%s7 + $0xcc] sm:$0xf]
      %v1895 = vld [vmem:[%s7 + $0xd0] sm:$0xf]
      %v1896 = vld [vmem:[%s7 + $0xd4] sm:$0xf]
      %v1897 = vld [vmem:[%s7 + $0xd8] sm:$0xf]
      %v1898 = vld [vmem:[%s7 + $0xdc] sm:$0xf]
      %v1899 = vld [vmem:[%s7 + $0xe0] sm:$0xf]
      %v1900 = vld [vmem:[%s7 + $0xe4] sm:$0xf]
      %v1901 = vld [vmem:[%s7 + $0xe8] sm:$0xf]
      %v1902 = vld [vmem:[%s7 + $0xec] sm:$0xf]
      %v1903 = vld [vmem:[%s7 + $0xf0] sm:$0xf]
      %v1904 = vld [vmem:[%s7 + $0xf4] sm:$0xf]
      %v1905 = vld [vmem:[%s7 + $0xf8] sm:$0xf]
      %v1906 = vld [vmem:[%s7 + $0xfc] sm:$0xf]
      %v1907 = vld [vmem:[%s7 + $0x100] sm:$0xf]
      %v1908 = vld [vmem:[%s7 + $0x104] sm:$0xf]
      %v1909 = vld [vmem:[%s7 + $0x108] sm:$0xf]
      %v1910 = vld [vmem:[%s7 + $0x10c] sm:$0xf]
      %v1911 = vld [vmem:[%s7 + $0x110] sm:$0xf]
      %v1912 = vld [vmem:[%s7 + $0x114] sm:$0xf]
      %v1913 = vld [vmem:[%s7 + $0x118] sm:$0xf]
      %v1914 = vld [vmem:[%s7 + $0x11c] sm:$0xf]
      %v1915 = vld [vmem:[%s7 + $0x120] sm:$0xf]
      %v1916 = vld [vmem:[%s7 + $0x124] sm:$0xf]
      %v1917 = vld [vmem:[%s7 + $0x128] sm:$0xf]
      %v1918 = vld [vmem:[%s7 + $0x12c] sm:$0xf]
      %v1919 = vld [vmem:[%s7 + $0x130] sm:$0xf]
      %v1920 = vld [vmem:[%s7 + $0x134] sm:$0xf]
      %v1921 = vld [vmem:[%s7 + $0x138] sm:$0xf]
      %v1922 = vld [vmem:[%s7 + $0x13c] sm:$0xf]
      %v1923 = vld [vmem:[%s7 + $0x140] sm:$0xf]
      %v1924 = vld [vmem:[%s7 + $0x144] sm:$0xf]
      %v1925 = vld [vmem:[%s7 + $0x148] sm:$0xf]
      %v1926 = vld [vmem:[%s7 + $0x14c] sm:$0xf]
      %v1927 = vld [vmem:[%s7 + $0x150] sm:$0xf]
      %v1928 = vld [vmem:[%s7 + $0x154] sm:$0xf]
      %v1929 = vld [vmem:[%s7 + $0x158] sm:$0xf]
      %v1930 = vld [vmem:[%s7 + $0x15c] sm:$0xf]
      %v1931 = vld [vmem:[%s7 + $0x160] sm:$0xf]
      %v1932 = vld [vmem:[%s7 + $0x164] sm:$0xf]
      %v1933 = vld [vmem:[%s7 + $0x168] sm:$0xf]
      %v1934 = vld [vmem:[%s7 + $0x16c] sm:$0xf]
      %v1935 = vld [vmem:[%s7 + $0x170] sm:$0xf]
      %v1936 = vld [vmem:[%s7 + $0x174] sm:$0xf]
      %v1937 = vld [vmem:[%s7 + $0x178] sm:$0xf]
      %v1938 = vld [vmem:[%s7 + $0x17c] sm:$0xf]
      %v1939 = vld [vmem:[%s7 + $0x180] sm:$0xf]
      %v1940 = vld [vmem:[%s7 + $0x184] sm:$0xf]
      %v1941 = vld [vmem:[%s7 + $0x188] sm:$0xf]
      %v1942 = vld [vmem:[%s7 + $0x18c] sm:$0xf]
      %v1943 = vld [vmem:[%s7 + $0x190] sm:$0xf]
      %v1944 = vld [vmem:[%s7 + $0x194] sm:$0xf]
      %v1945 = vld [vmem:[%s7 + $0x198] sm:$0xf]
      %v1946 = vld [vmem:[%s7 + $0x19c] sm:$0xf]
      %v1947 = vld [vmem:[%s7 + $0x1a0] sm:$0xf]
      %v1948 = vld [vmem:[%s7 + $0x1a4] sm:$0xf]
      %v1949 = vld [vmem:[%s7 + $0x1a8] sm:$0xf]
      %v1950 = vld [vmem:[%s7 + $0x1ac] sm:$0xf]
      %v1951 = vld [vmem:[%s7 + $0x1b0] sm:$0xf]
      %v1952 = vld [vmem:[%s7 + $0x1b4] sm:$0xf]
      %v1953 = vld [vmem:[%s7 + $0x1b8] sm:$0xf]
      %v1954 = vld [vmem:[%s7 + $0x1bc] sm:$0xf]
      %v1955 = vld [vmem:[%s8] sm:$0x1]
      %v1957 = vlaneseq
      %v1958 = vshrl.u32 %v1957, 7
      %v1959 = vsub.s32 0, %v1958
      %v1960 = vrot.slane %v1955, %v1959
      %v2074 = vunpack.c.l.b16 %v1843
      %v2075 = vunpack.c.l.b16 %v1844
      %v2076 = vunpack.c.l.b16 %v1845
      %v2077 = vunpack.c.l.b16 %v1846
      %v2078 = vunpack.c.l.b16 %v1847
      %v2079 = vunpack.c.l.b16 %v1848
      %v2080 = vunpack.c.l.b16 %v1849
      %v2081 = vunpack.c.l.b16 %v1850
      %v2082 = vunpack.c.l.b16 %v1851
      %v2083 = vunpack.c.l.b16 %v1852
      %v2084 = vunpack.c.l.b16 %v1853
      %v2085 = vunpack.c.l.b16 %v1854
      %v2086 = vunpack.c.l.b16 %v1855
      %v2087 = vunpack.c.l.b16 %v1856
      %v2088 = vunpack.c.l.b16 %v1857
      %v2089 = vunpack.c.l.b16 %v1858
      %v2090 = vunpack.c.l.b16 %v1859
      %v2091 = vunpack.c.l.b16 %v1860
      %v2092 = vunpack.c.l.b16 %v1861
      %v2093 = vunpack.c.l.b16 %v1862
      %v2094 = vunpack.c.l.b16 %v1863
      %v2095 = vunpack.c.l.b16 %v1864
      %v2096 = vunpack.c.l.b16 %v1865
      %v2097 = vunpack.c.l.b16 %v1866
      %v2098 = vunpack.c.l.b16 %v1867
      %v2099 = vunpack.c.l.b16 %v1868
      %v2100 = vunpack.c.l.b16 %v1869
      %v2101 = vunpack.c.l.b16 %v1870
      %v2102 = vunpack.c.l.b16 %v1871
      %v2103 = vunpack.c.l.b16 %v1872
      %v2104 = vunpack.c.l.b16 %v1873
      %v2105 = vunpack.c.l.b16 %v1874
      %v2106 = vunpack.c.l.b16 %v1875
      %v2107 = vunpack.c.l.b16 %v1876
      %v2108 = vunpack.c.l.b16 %v1877
      %v2109 = vunpack.c.l.b16 %v1878
      %v2110 = vunpack.c.l.b16 %v1879
      %v2111 = vunpack.c.l.b16 %v1880
      %v2112 = vunpack.c.l.b16 %v1881
      %v2113 = vunpack.c.l.b16 %v1882
      %v2114 = vunpack.c.l.b16 %v1883
      %v2115 = vunpack.c.l.b16 %v1884
      %v2116 = vunpack.c.l.b16 %v1885
      %v2117 = vunpack.c.l.b16 %v1886
      %v2118 = vunpack.c.l.b16 %v1887
      %v2119 = vunpack.c.l.b16 %v1888
      %v2120 = vunpack.c.l.b16 %v1889
      %v2121 = vunpack.c.l.b16 %v1890
      %v2122 = vunpack.c.l.b16 %v1891
      %v2123 = vunpack.c.l.b16 %v1892
      %v2124 = vunpack.c.l.b16 %v1893
      %v2125 = vunpack.c.l.b16 %v1894
      %v2126 = vunpack.c.l.b16 %v1895
      %v2127 = vunpack.c.l.b16 %v1896
      %v2128 = vunpack.c.l.b16 %v1897
      %v2129 = vunpack.c.l.b16 %v1898
      %v2130 = vunpack.c.l.b16 %v1899
      %v2131 = vunpack.c.l.b16 %v1900
      %v2132 = vunpack.c.l.b16 %v1901
      %v2133 = vunpack.c.l.b16 %v1902
      %v2134 = vunpack.c.l.b16 %v1903
      %v2135 = vunpack.c.l.b16 %v1904
      %v2136 = vunpack.c.l.b16 %v1905
      %v2137 = vunpack.c.l.b16 %v1906
      %v2138 = vunpack.c.l.b16 %v1907
      %v2139 = vunpack.c.l.b16 %v1908
      %v2140 = vunpack.c.l.b16 %v1909
      %v2141 = vunpack.c.l.b16 %v1910
      %v2142 = vunpack.c.l.b16 %v1911
      %v2143 = vunpack.c.l.b16 %v1912
      %v2144 = vunpack.c.l.b16 %v1913
      %v2145 = vunpack.c.l.b16 %v1914
      %v2146 = vunpack.c.l.b16 %v1915
      %v2147 = vunpack.c.l.b16 %v1916
      %v2148 = vunpack.c.l.b16 %v1917
      %v2149 = vunpack.c.l.b16 %v1918
      %v2150 = vunpack.c.l.b16 %v1919
      %v2151 = vunpack.c.l.b16 %v1920
      %v2152 = vunpack.c.l.b16 %v1921
      %v2153 = vunpack.c.l.b16 %v1922
      %v2154 = vunpack.c.l.b16 %v1923
      %v2155 = vunpack.c.l.b16 %v1924
      %v2156 = vunpack.c.l.b16 %v1925
      %v2157 = vunpack.c.l.b16 %v1926
      %v2158 = vunpack.c.l.b16 %v1927
      %v2159 = vunpack.c.l.b16 %v1928
      %v2160 = vunpack.c.l.b16 %v1929
      %v2161 = vunpack.c.l.b16 %v1930
      %v2162 = vunpack.c.l.b16 %v1931
      %v2163 = vunpack.c.l.b16 %v1932
      %v2164 = vunpack.c.l.b16 %v1933
      %v2165 = vunpack.c.l.b16 %v1934
      %v2166 = vunpack.c.l.b16 %v1935
      %v2167 = vunpack.c.l.b16 %v1936
      %v2168 = vunpack.c.l.b16 %v1937
      %v2169 = vunpack.c.l.b16 %v1938
      %v2170 = vunpack.c.l.b16 %v1939
      %v2171 = vunpack.c.l.b16 %v1940
      %v2172 = vunpack.c.l.b16 %v1941
      %v2173 = vunpack.c.l.b16 %v1942
      %v2174 = vunpack.c.l.b16 %v1943
      %v2175 = vunpack.c.l.b16 %v1944
      %v2176 = vunpack.c.l.b16 %v1945
      %v2177 = vunpack.c.l.b16 %v1946
      %v2178 = vunpack.c.l.b16 %v1947
      %v2179 = vunpack.c.l.b16 %v1948
      %v2180 = vunpack.c.l.b16 %v1949
      %v2181 = vunpack.c.l.b16 %v1950
      %v2182 = vunpack.c.l.b16 %v1951
      %v2183 = vunpack.c.l.b16 %v1952
      %v2184 = vunpack.c.l.b16 %v1953
      %v2185 = vunpack.c.l.b16 %v1954
      %v2186 = vpack.c.b16 %v2075, %v2074
      %v2187 = vpack.c.b16 %v2077, %v2076
      %v2188 = vpack.c.b16 %v2079, %v2078
      %v2189 = vpack.c.b16 %v2081, %v2080
      %v2190 = vpack.c.b16 %v2083, %v2082
      %v2191 = vpack.c.b16 %v2085, %v2084
      %v2192 = vpack.c.b16 %v2087, %v2086
      %v2193 = vpack.c.b16 %v2089, %v2088
      %v2194 = vpack.c.b16 %v2091, %v2090
      %v2195 = vpack.c.b16 %v2093, %v2092
      %v2196 = vpack.c.b16 %v2095, %v2094
      %v2197 = vpack.c.b16 %v2097, %v2096
      %v2198 = vpack.c.b16 %v2099, %v2098
      %v2199 = vpack.c.b16 %v2101, %v2100
      %v2200 = vpack.c.b16 %v2103, %v2102
      %v2201 = vpack.c.b16 %v2105, %v2104
      %v2202 = vpack.c.b16 %v2107, %v2106
      %v2203 = vpack.c.b16 %v2109, %v2108
      %v2204 = vpack.c.b16 %v2111, %v2110
      %v2205 = vpack.c.b16 %v2113, %v2112
      %v2206 = vpack.c.b16 %v2115, %v2114
      %v2207 = vpack.c.b16 %v2117, %v2116
      %v2208 = vpack.c.b16 %v2119, %v2118
      %v2209 = vpack.c.b16 %v2121, %v2120
      %v2210 = vpack.c.b16 %v2123, %v2122
      %v2211 = vpack.c.b16 %v2125, %v2124
      %v2212 = vpack.c.b16 %v2127, %v2126
      %v2213 = vpack.c.b16 %v2129, %v2128
      %v2214 = vpack.c.b16 %v2131, %v2130
      %v2215 = vpack.c.b16 %v2133, %v2132
      %v2216 = vpack.c.b16 %v2135, %v2134
      %v2217 = vpack.c.b16 %v2137, %v2136
      %v2218 = vpack.c.b16 %v2139, %v2138
      %v2219 = vpack.c.b16 %v2141, %v2140
      %v2220 = vpack.c.b16 %v2143, %v2142
      %v2221 = vpack.c.b16 %v2145, %v2144
      %v2222 = vpack.c.b16 %v2147, %v2146
      %v2223 = vpack.c.b16 %v2149, %v2148
      %v2224 = vpack.c.b16 %v2151, %v2150
      %v2225 = vpack.c.b16 %v2153, %v2152
      %v2226 = vpack.c.b16 %v2155, %v2154
      %v2227 = vpack.c.b16 %v2157, %v2156
      %v2228 = vpack.c.b16 %v2159, %v2158
      %v2229 = vpack.c.b16 %v2161, %v2160
      %v2230 = vpack.c.b16 %v2163, %v2162
      %v2231 = vpack.c.b16 %v2165, %v2164
      %v2232 = vpack.c.b16 %v2167, %v2166
      %v2233 = vpack.c.b16 %v2169, %v2168
      %v2234 = vpack.c.b16 %v2171, %v2170
      %v2235 = vpack.c.b16 %v2173, %v2172
      %v2236 = vpack.c.b16 %v2175, %v2174
      %v2237 = vpack.c.b16 %v2177, %v2176
      %v2238 = vpack.c.b16 %v2179, %v2178
      %v2239 = vpack.c.b16 %v2181, %v2180
      %v2240 = vpack.c.b16 %v2183, %v2182
      %v2241 = vpack.c.b16 %v2185, %v2184
      %2298 = vmatprep.subr.bf16.mxu0 0
      %2299 = vmatpush1.bf16.msra.mxu0 %v2186
      %2300 = vmatprep.subr.bf16.mxu0 0
      %2301 = vmatpush1.bf16.msra.mxu0 %v2187
      %2302 = vmatprep.subr.bf16.mxu0 0
      %2303 = vmatpush1.bf16.msra.mxu0 %v2188
      %2304 = vmatprep.subr.bf16.mxu0 0
      %2305 = vmatpush1.bf16.msra.mxu0 %v2189
      %2306 = vmatprep.subr.bf16.mxu0 0
      %2307 = vmatpush1.bf16.msra.mxu0 %v2190
      %2308 = vmatprep.subr.bf16.mxu0 0
      %2309 = vmatpush1.bf16.msra.mxu0 %v2191
      %2310 = vmatprep.subr.bf16.mxu0 0
      %2311 = vmatpush1.bf16.msra.mxu0 %v2192
      %2312 = vmatprep.subr.bf16.mxu0 0
      %2313 = vmatpush1.bf16.msra.mxu0 %v2193
      %2314 = vmatprep.subr.bf16.mxu0 0
      %2315 = vmatpush1.bf16.msra.mxu0 %v2194
      %2316 = vmatprep.subr.bf16.mxu0 0
      %2317 = vmatpush1.bf16.msra.mxu0 %v2195
      %2318 = vmatprep.subr.bf16.mxu0 0
      %2319 = vmatpush1.bf16.msra.mxu0 %v2196
      %2320 = vmatprep.subr.bf16.mxu0 0
      %2321 = vmatpush1.bf16.msra.mxu0 %v2197
      %2322 = vmatprep.subr.bf16.mxu0 0
      %2323 = vmatpush1.bf16.msra.mxu0 %v2198
      %2324 = vmatprep.subr.bf16.mxu0 0
      %2325 = vmatpush1.bf16.msra.mxu0 %v2199
      %2326 = vmatprep.subr.bf16.mxu0 0
      %2327 = vmatpush1.bf16.msra.mxu0 %v2200
      %2328 = vmatprep.subr.bf16.mxu0 0
      %2329 = vmatpush1.bf16.msra.mxu0 %v2201
      %2330 = vmatprep.mubr.bf16.mxu0 %v1837
      %2331 = vmatmul.mubr.bf16.gmra.mrb[0].mxu0 %v1836
      %v2332 = vpop.f32.mrb[0].mxu0
      %v2333 = vadd.f32 %v1960, %v2332
      %v2334 = vpop.f32.mrb[0].mxu0
      %v2335 = vpop.f32.mrb[0].mxu0
      %v2336 = vadd.f32 %v1960, %v2335
      %v2337 = vpop.f32.mrb[0].mxu0
      %2338 = vdwg.mxu0
      %2339 = vmatprep.subr.bf16.mxu0 0
      %2340 = vmatpush1.bf16.msra.mxu0 %v2202
      %2341 = vmatprep.subr.bf16.mxu0 0
      %2342 = vmatpush1.bf16.msra.mxu0 %v2203
      %2343 = vmatprep.subr.bf16.mxu0 0
      %2344 = vmatpush1.bf16.msra.mxu0 %v2204
      %2345 = vmatprep.subr.bf16.mxu0 0
      %2346 = vmatpush1.bf16.msra.mxu0 %v2205
      %2347 = vmatprep.subr.bf16.mxu0 0
      %2348 = vmatpush1.bf16.msra.mxu0 %v2206
      %2349 = vmatprep.subr.bf16.mxu0 0
      %2350 = vmatpush1.bf16.msra.mxu0 %v2207
      %2351 = vmatprep.subr.bf16.mxu0 0
      %2352 = vmatpush1.bf16.msra.mxu0 %v2208
      %2353 = vmatprep.subr.bf16.mxu0 0
      %2354 = vmatpush1.bf16.msra.mxu0 %v2209
      %2355 = vmatprep.subr.bf16.mxu0 0
      %2356 = vmatpush1.bf16.msra.mxu0 %v2210
      %2357 = vmatprep.subr.bf16.mxu0 0
      %2358 = vmatpush1.bf16.msra.mxu0 %v2211
      %2359 = vmatprep.subr.bf16.mxu0 0
      %2360 = vmatpush1.bf16.msra.mxu0 %v2212
      %2361 = vmatprep.subr.bf16.mxu0 0
      %2362 = vmatpush1.bf16.msra.mxu0 %v2213
      %2363 = vmatprep.subr.bf16.mxu0 0
      %2364 = vmatpush1.bf16.msra.mxu0 %v2214
      %2365 = vmatprep.subr.bf16.mxu0 0
      %2366 = vmatpush1.bf16.msra.mxu0 %v2215
      %2367 = vmatprep.subr.bf16.mxu0 0
      %2368 = vmatpush1.bf16.msra.mxu0 %v2216
      %2369 = vmatprep.subr.bf16.mxu0 0
      %2370 = vmatpush1.bf16.msra.mxu0 %v2217
      %2371 = vmatprep.mubr.bf16.mxu0 %v1839
      %2372 = vmatmul.mubr.bf16.gmra.mrb[0].mxu0 %v1838
      %v2373 = vpop.f32.mrb[0].mxu0
      %v2374 = vadd.f32 %v2333, %v2373
      %v2375 = vpop.f32.mrb[0].mxu0
      %v2376 = vpop.f32.mrb[0].mxu0
      %v2377 = vadd.f32 %v2336, %v2376
      %v2378 = vpop.f32.mrb[0].mxu0
      %2379 = vdwg.mxu0
      %2380 = vmatprep.subr.bf16.mxu0 0
      %2381 = vmatpush1.bf16.msra.mxu0 %v2218
      %2382 = vmatprep.subr.bf16.mxu0 0
      %2383 = vmatpush1.bf16.msra.mxu0 %v2219
      %2384 = vmatprep.subr.bf16.mxu0 0
      %2385 = vmatpush1.bf16.msra.mxu0 %v2220
      %2386 = vmatprep.subr.bf16.mxu0 0
      %2387 = vmatpush1.bf16.msra.mxu0 %v2221
      %2388 = vmatprep.subr.bf16.mxu0 0
      %2389 = vmatpush1.bf16.msra.mxu0 %v2222
      %2390 = vmatprep.subr.bf16.mxu0 0
      %2391 = vmatpush1.bf16.msra.mxu0 %v2223
      %2392 = vmatprep.subr.bf16.mxu0 0
      %2393 = vmatpush1.bf16.msra.mxu0 %v2224
      %2394 = vmatprep.subr.bf16.mxu0 0
      %2395 = vmatpush1.bf16.msra.mxu0 %v2225
      %2396 = vmatprep.subr.bf16.mxu0 0
      %2397 = vmatpush1.bf16.msra.mxu0 %v2226
      %2398 = vmatprep.subr.bf16.mxu0 0
      %2399 = vmatpush1.bf16.msra.mxu0 %v2227
      %2400 = vmatprep.subr.bf16.mxu0 0
      %2401 = vmatpush1.bf16.msra.mxu0 %v2228
      %2402 = vmatprep.subr.bf16.mxu0 0
      %2403 = vmatpush1.bf16.msra.mxu0 %v2229
      %2404 = vmatprep.subr.bf16.mxu0 0
      %2405 = vmatpush1.bf16.msra.mxu0 %v2230
      %2406 = vmatprep.subr.bf16.mxu0 0
      %2407 = vmatpush1.bf16.msra.mxu0 %v2231
      %2408 = vmatprep.subr.bf16.mxu0 0
      %2409 = vmatpush1.bf16.msra.mxu0 %v2232
      %2410 = vmatprep.subr.bf16.mxu0 0
      %2411 = vmatpush1.bf16.msra.mxu0 %v2233
      %2412 = vmatprep.mubr.bf16.mxu0 %v1841
      %2413 = vmatmul.mubr.bf16.gmra.mrb[0].mxu0 %v1840
      %v2414 = vpop.f32.mrb[0].mxu0
      %v2415 = vadd.f32 %v2374, %v2414
      %v2416 = vpop.f32.mrb[0].mxu0
      %v2417 = vpop.f32.mrb[0].mxu0
      %v2418 = vadd.f32 %v2377, %v2417
      %v2419 = vpop.f32.mrb[0].mxu0
      %2420 = vdwg.mxu0
      %2421 = vmatprep.subr.bf16.mxu0 0
      %2422 = vmatpush1.bf16.msra.mxu0 %v2234
      %2423 = vmatprep.subr.bf16.mxu0 0
      %2424 = vmatpush1.bf16.msra.mxu0 %v2235
      %2425 = vmatprep.subr.bf16.mxu0 0
      %2426 = vmatpush1.bf16.msra.mxu0 %v2236
      %2427 = vmatprep.subr.bf16.mxu0 0
      %2428 = vmatpush1.bf16.msra.mxu0 %v2237
      %2429 = vmatprep.subr.bf16.mxu0 0
      %2430 = vmatpush1.bf16.msra.mxu0 %v2238
      %2431 = vmatprep.subr.bf16.mxu0 0
      %2432 = vmatpush1.bf16.msra.mxu0 %v2239
      %2433 = vmatprep.subr.bf16.mxu0 0
      %2434 = vmatpush1.bf16.msra.mxu0 %v2240
      %2435 = vmatprep.subr.bf16.mxu0 0
      %2436 = vmatpush1.bf16.msra.mxu0 %v2241
      %2437 = vmatprep.subr.bf16.mxu0 0
      %2438 = vmatpush1.bf16.msra.mxu0 0
      %2439 = vmatprep.subr.bf16.mxu0 0
      %2440 = vmatpush1.bf16.msra.mxu0 0
      %2441 = vmatprep.subr.bf16.mxu0 0
      %2442 = vmatpush1.bf16.msra.mxu0 0
      %2443 = vmatprep.subr.bf16.mxu0 0
      %2444 = vmatpush1.bf16.msra.mxu0 0
      %2445 = vmatprep.subr.bf16.mxu0 0
      %2446 = vmatpush1.bf16.msra.mxu0 0
      %2447 = vmatprep.subr.bf16.mxu0 0
      %2448 = vmatpush1.bf16.msra.mxu0 0
      %2449 = vmatprep.subr.bf16.mxu0 0
      %2450 = vmatpush1.bf16.msra.mxu0 0
      %2451 = vmatprep.subr.bf16.mxu0 0
      %2452 = vmatpush1.bf16.msra.mxu0 0
      %2453 = vmatprep.mubr.bf16.mxu0 0
      %2454 = vmatmul.mubr.bf16.gmra.mrb[0].mxu0 %v1842
      %v2455 = vpop.f32.mrb[0].mxu0
      %v2456 = vadd.f32 %v2415, %v2455
      %v2457 = vpop.f32.mrb[0].mxu0
      %v2458 = vpop.f32.mrb[0].mxu0
      %v2459 = vadd.f32 %v2418, %v2458
      %v2460 = vpop.f32.mrb[0].mxu0
      %2461 = vdwg.mxu0
      %v2462 = vadd.f32 %v1448, %v2456
      %v2463 = vadd.f32 %v1451, %v2459
      %2464 = vst [vmem:[%s332] sm:$0xff] %v2462
      %2465 = vst [vmem:[%s332 + $0x8] sm:$0xff] %v2463
      %p2466 = scmp.lt.s32.totalorder %s20, 1
      %s2467 = scalar_select %p2466, %s20, 1
      %s2468 = smul.addr %s2467, 2
      %s2469 = smul.addr %s2468, 8
      %s2470 = scalar_lea.vmem %s9, %s2469
      // Predicated region
      $region57: #{gcn_forward.1} parent=55 // pred_check
        %p2471 = pneg %p232
      $region58: #{gcn_forward.1} parent=55 // pred_check_branch
        %2473 = sbr.rel (%p2471) target = $region60
      $region59: #{gcn_forward.1} parent=55 // pred_region
        _
      $region60: #{gcn_forward.1} parent=55 // pred_fallthru
        _
    $region56: #{gcn_forward.1} parent=5 // pred_fallthru
      _
    %p2474 = scmp.le.s32.totalorder 2, %s15
    // Predicated region
    $region61: #{gcn_forward.1} parent=5 // pred_check
      %p2475 = pneg %p2474
    $region62: #{gcn_forward.1} parent=5 // pred_check_branch
      %2477 = sbr.rel (%p2475) target = $region64
    $region63: #{gcn_forward.1} parent=5 // pred_region
      %s2478 = ssub.s32 %s15, 2
      // Predicated region
      $region65: #{gcn_forward.1} parent=63 // pred_check
        %p2479 = pneg %p238
      $region66: #{gcn_forward.1} parent=63 // pred_check_branch
        %2481 = sbr.rel (%p2479) target = $region68
      $region67: #{gcn_forward.1} parent=63 // pred_region
        %p2482 = scmp.lt.s32.totalorder %s21, 1
        %s2483 = scalar_select %p2482, %s21, 1
        %s2484 = smul.addr %s2483, 2
        %s2485 = smul.addr %s2484, 8
        %s2486 = scalar_lea.vmem %s9, %s2485
      $region68: #{gcn_forward.1} parent=63 // pred_fallthru
        _
    $region64: #{gcn_forward.1} parent=5 // pred_fallthru
      _
  $region6: #{gcn_forward.1} parent=0 // loop_footer
    %s19 = sadd.s32 1, %s15
  $region7: #{gcn_forward.1} parent=0 // loop_footer_branch
    %14 = sbr.rel target = $region3
  $region8: #{gcn_forward.1} parent=0 // loop_exit
    _

</llo_original>
